<compile_context>
chip_gen: v7x
topology: tpu7x:2x2x1
jax: 0.10.0
libtpu: 0.0.40
codegen_flags: <defaults>
</compile_context>

<pallas_src>
import numpy as np
import jax
import jax.numpy as jnp
from jax import lax
from jax.experimental import pallas as pl
from jax.experimental.pallas import tpu as pltpu


# --------------------------------------------------------------------------- #
# One-time host-side weight packing (NOT on the per-call path)
# --------------------------------------------------------------------------- #
def _conv_band_matrices(w, w_in):
    """PyTorch conv weight (Cout, Cin, 5, 5) -> band matrices (5, W*Cin, OW*Cout).

    With a per-sample activation map stored as A[h, w*Cin + cin], the conv is
        out[oh, ow*Cout + co] = sum_kh (A[oh+kh, :] @ band[kh])[ow*Cout + co]
    i.e. each kh contributes one plain 2-D matmul along the W axis.
    """
    w = np.asarray(w, np.float32)
    cout, cin, k, _ = w.shape
    ow = w_in - k + 1
    band = np.zeros((k, w_in * cin, ow * cout), np.float32)
    for kh in range(k):
        for kw in range(k):
            blk = w[:, :, kh, kw].T                      # (Cin, Cout)
            for o in range(ow):
                wp = o + kw
                band[kh, wp * cin:(wp + 1) * cin, o * cout:(o + 1) * cout] = blk
    return band


def _pool_decimation(oh, ow, nc):
    """0/1 matrices picking even rows / even-ow lanes of an (OH, OW*nc) map."""
    sh = np.zeros((oh // 2, oh - 1), np.float32)
    sh[np.arange(oh // 2), 2 * np.arange(oh // 2)] = 1.0
    sw = np.zeros(((ow - 1) * nc, (ow // 2) * nc), np.float32)
    for j in range(ow // 2):
        for c in range(nc):
            sw[2 * j * nc + c, j * nc + c] = 1.0
    return sh, sw


def _tile_bias(b, ow):
    return np.tile(np.asarray(b, np.float32), ow).reshape(1, -1)


def init_params(key):
    ks = jax.random.split(key, 10)

    def w(k, shape, scale=0.1):
        return jax.random.normal(k, shape, jnp.float32) * scale

    return {
        "w1": w(ks[0], (6, 1, 5, 5)),    "b1": w(ks[1], (6,)),
        "w2": w(ks[2], (16, 6, 5, 5)),   "b2": w(ks[3], (16,)),
        "w3": w(ks[4], (120, 16, 5, 5)), "b3": w(ks[5], (120,)),
        "fc1_w": w(ks[6], (84, 120)),    "fc1_b": w(ks[7], (84,)),
        "fc2_w": w(ks[8], (10, 84)),     "fc2_b": w(ks[9], (10,)),
    }


_PACK_ORDER = ("b1", "c1b", "sh1", "sw1",
               "b2", "c2b", "sh2", "sw2",
               "b3", "c3b", "f1w", "f1b", "f2w", "f2b")


def pack_params(params):
    """Pack / pad / transpose / bf16-cast all weights once, at init time."""
    bf16, f32 = jnp.bfloat16, jnp.float32
    sh1, sw1 = _pool_decimation(28, 28, 6)
    sh2, sw2 = _pool_decimation(10, 10, 16)

    f1w = np.zeros((120, 128), np.float32)
    f1w[:, :84] = np.asarray(params["fc1_w"], np.float32).T
    f1b = np.zeros((1, 128), np.float32)
    f1b[0, :84] = np.asarray(params["fc1_b"], np.float32)
    f2w = np.zeros((128, 128), np.float32)      # rows 84: zero-pad, cols 10: zero-pad
    f2w[:84, :10] = np.asarray(params["fc2_w"], np.float32).T
    f2b = np.zeros((1, 128), np.float32)
    f2b[0, :10] = np.asarray(params["fc2_b"], np.float32)

    return {
        "b1": jnp.asarray(_conv_band_matrices(params["w1"], 32), bf16),   # (5, 32, 168)
        "c1b": jnp.asarray(_tile_bias(params["b1"], 28), f32),            # (1, 168)
        "sh1": jnp.asarray(sh1, bf16),                                    # (14, 27)
        "sw1": jnp.asarray(sw1, bf16),                                    # (162, 84)
        "b2": jnp.asarray(_conv_band_matrices(params["w2"], 14), bf16),   # (5, 84, 160)
        "c2b": jnp.asarray(_tile_bias(params["b2"], 10), f32),            # (1, 160)
        "sh2": jnp.asarray(sh2, bf16),                                    # (5, 9)
        "sw2": jnp.asarray(sw2, bf16),                                    # (144, 80)
        "b3": jnp.asarray(_conv_band_matrices(params["w3"], 5), bf16),    # (5, 80, 120)
        "c3b": jnp.asarray(_tile_bias(params["b3"], 1), f32),             # (1, 120)
        "f1w": jnp.asarray(f1w, bf16),                                    # (120, 128)
        "f1b": jnp.asarray(f1b, f32),                                     # (1, 128)
        "f2w": jnp.asarray(f2w, bf16),                                    # (128, 128)
        "f2b": jnp.asarray(f2b, f32),                                     # (1, 128)
    }


# --------------------------------------------------------------------------- #
# Fused Pallas kernel: one grid step == one sample, end-to-end in VMEM
# --------------------------------------------------------------------------- #
def _lenet5_kernel(x_ref, b1_ref, c1b_ref, sh1_ref, sw1_ref,
                   b2_ref, c2b_ref, sh2_ref, sw2_ref,
                   b3_ref, c3b_ref, f1w_ref, f1b_ref, f2w_ref, f2b_ref,
                   out_ref):
    f32, bf16 = jnp.float32, jnp.bfloat16

    def conv_band(a, band_ref, bias_ref, oh):
        # a: (H, W*Cin) f32 ; band_ref: (5, W*Cin, OW*Cout) bf16
        # returns relu(conv + bias): (OH, OW*Cout) f32  (bf16 operands, f32 acc)
        acc = jnp.dot(a[0:oh, :].astype(bf16), band_ref[0],
                      preferred_element_type=f32)
        for kh in range(1, 5):
            acc += jnp.dot(a[kh:kh + oh, :].astype(bf16), band_ref[kh],
                           preferred_element_type=f32)
        return jnp.maximum(acc + bias_ref[...], 0.0)

    def maxpool(y, shr_ref, swr_ref, nc):
        # y: (OH, OW*nc) relu'd conv output; 2x2/stride-2 max pool.
        oh, lanes = y.shape
        ya = jnp.maximum(y[0:oh - 1, :], y[1:oh, :])                # 2x1 max (rows)
        yb = jnp.maximum(ya[:, 0:lanes - nc], ya[:, nc:lanes])      # 1x2 max (ow lanes)
        yb = yb.astype(bf16)
        z = jnp.dot(shr_ref[...], yb, preferred_element_type=f32)   # keep even rows
        return jnp.dot(z.astype(bf16), swr_ref[...],
                       preferred_element_type=f32)                  # keep even ow

    x = x_ref[...]                               # (32, 32) f32, one sample
    y = conv_band(x, b1_ref, c1b_ref, 28)        # conv1 + relu1 -> (28, 28*6)
    p = maxpool(y, sh1_ref, sw1_ref, 6)          # pool1         -> (14, 14*6)
    y = conv_band(p, b2_ref, c2b_ref, 10)        # conv2 + relu2 -> (10, 10*16)
    p = maxpool(y, sh2_ref, sw2_ref, 16)         # pool2         -> (5, 5*16)
    f = conv_band(p, b3_ref, c3b_ref, 1)         # conv3 + relu3 -> (1, 120) == flatten

    h = jnp.maximum(jnp.dot(f.astype(bf16), f1w_ref[...],
                            preferred_element_type=f32) + f1b_ref[...], 0.0)   # fc1+relu4
    o = jnp.maximum(jnp.dot(h.astype(bf16), f2w_ref[...],
                            preferred_element_type=f32) + f2b_ref[...], 0.0)   # fc2+relu5
    out_ref[...] = o                             # lane-dense (1, 128) store


def _resident_spec(a):
    # Full-array block with a constant index_map: stays resident in VMEM
    # across all grid steps (no per-step re-DMA of the weights).
    nd = a.ndim
    return pl.BlockSpec(a.shape, lambda i, _nd=nd: (0,) * _nd)


def lenet5_forward(packed, x_nchw):
    n = x_nchw.shape[0]
    x = x_nchw.reshape(n, 32, 32).astype(jnp.float32)   # squeeze channel=1
    weights = [packed[k] for k in _PACK_ORDER]

    out = pl.pallas_call(
        _lenet5_kernel,
        out_shape=jax.ShapeDtypeStruct((n, 1, 128), jnp.float32),
        grid=(n,),
        in_specs=[pl.BlockSpec((None, 32, 32), lambda i: (i, 0, 0))]
                 + [_resident_spec(a) for a in weights],
        out_specs=pl.BlockSpec((None, 1, 128), lambda i: (i, 0, 0)),
        compiler_params=pltpu.CompilerParams(
            dimension_semantics=("parallel",)),
    )(x, *weights)
    return out[:, 0, :10]                                # drop the lane padding


# --------------------------------------------------------------------------- #
# Pure-JAX reference.  operand_dtype=bf16 reproduces the kernel's matmul policy
# (round operands to bf16, accumulate in f32) so the check can be tight.
# --------------------------------------------------------------------------- #
def lenet5_reference(params, x, operand_dtype=jnp.float32):
    f32 = jnp.float32
    q = lambda a: a.astype(operand_dtype).astype(f32)

    def conv(x, w, b):
        y = lax.conv_general_dilated(
            q(x), q(w), (1, 1), "VALID",
            dimension_numbers=("NCHW", "OIHW", "NCHW"))
        return y + b.reshape(1, -1, 1, 1)

    def pool(x):
        return lax.reduce_window(
            x, -jnp.inf, lax.max, (1, 1, 2, 2), (1, 1, 2, 2), "VALID")

    y = pool(jnp.maximum(conv(x, params["w1"], params["b1"]), 0.0))
    y = pool(jnp.maximum(conv(y, params["w2"], params["b2"]), 0.0))
    y = jnp.maximum(conv(y, params["w3"], params["b3"]), 0.0)
    y = y.reshape(y.shape[0], -1)
    y = jnp.maximum(jnp.dot(q(y), q(params["fc1_w"].T)) + params["fc1_b"], 0.0)
    y = jnp.maximum(jnp.dot(q(y), q(params["fc2_w"].T)) + params["fc2_b"], 0.0)
    return y


if __name__ == "__main__":
    key = jax.random.PRNGKey(0)
    pkey, xkey = jax.random.split(key)
    params = init_params(pkey)
    packed = pack_params(params)                 # one-time host-side packing
    # LeNet5 with conv3(16->120, 5x5) feeding fc1(120) requires 1x32x32 input.
    x = jax.random.normal(xkey, (2, 1, 32, 32), jnp.float32)

    out = jax.jit(lenet5_forward)(packed, x)
    out = jax.block_until_ready(out)

    assert out.shape == (2, 10), out.shape
    assert bool(jnp.all(jnp.isfinite(out)))

    # Tight check against a reference that uses the SAME bf16-operand /
    # f32-accumulate policy as the kernel (catches packing / layout / pooling
    # bugs without being masked by quantization noise).
    ref_match = lenet5_reference(params, x, operand_dtype=jnp.bfloat16)
    assert bool(jnp.allclose(out, ref_match, atol=5e-3, rtol=5e-3)), (out, ref_match)

    # Loose check against the pure-f32 model: bounds the bf16 quantization error.
    ref_f32 = lenet5_reference(params, x, operand_dtype=jnp.float32)
    assert bool(jnp.allclose(out, ref_f32, atol=5e-2, rtol=5e-2)), (out, ref_f32)

    print("KERNEL_OK")
</pallas_src>

<mosaic_0001>
module attributes {stable_mosaic.version = 11 : i64} {
  func.func @_lenet5_kernel(%arg0: i32, %arg1: memref<1x32x32xf32, #tpu.memory_space<vmem>>, %arg2: memref<5x32x168xbf16, #tpu.memory_space<vmem>>, %arg3: memref<1x168xf32, #tpu.memory_space<vmem>>, %arg4: memref<14x27xbf16, #tpu.memory_space<vmem>>, %arg5: memref<162x84xbf16, #tpu.memory_space<vmem>>, %arg6: memref<5x84x160xbf16, #tpu.memory_space<vmem>>, %arg7: memref<1x160xf32, #tpu.memory_space<vmem>>, %arg8: memref<5x9xbf16, #tpu.memory_space<vmem>>, %arg9: memref<144x80xbf16, #tpu.memory_space<vmem>>, %arg10: memref<5x80x120xbf16, #tpu.memory_space<vmem>>, %arg11: memref<1x120xf32, #tpu.memory_space<vmem>>, %arg12: memref<120x128xbf16, #tpu.memory_space<vmem>>, %arg13: memref<1x128xf32, #tpu.memory_space<vmem>>, %arg14: memref<128x128xbf16, #tpu.memory_space<vmem>>, %arg15: memref<1x128xf32, #tpu.memory_space<vmem>>, %arg16: memref<1x1x128xf32, #tpu.memory_space<vmem>>) attributes {dimension_semantics = [#tpu.dimension_semantics<parallel>], iteration_bounds = array<i64: 2>, scalar_prefetch = 0 : i64, scratch_operands = 0 : i64, tpu.core_type = #tpu.core_type<tc>, window_params = [{transform_indices = @transform_0, window_bounds = array<i64: 1, 32, 32>}, {pipeline_mode = #tpu.pipeline_mode<synchronous>, transform_indices = @transform_1, window_bounds = array<i64: 5, 32, 168>}, {pipeline_mode = #tpu.pipeline_mode<synchronous>, transform_indices = @transform_2, window_bounds = array<i64: 1, 168>}, {pipeline_mode = #tpu.pipeline_mode<synchronous>, transform_indices = @transform_3, window_bounds = array<i64: 14, 27>}, {pipeline_mode = #tpu.pipeline_mode<synchronous>, transform_indices = @transform_4, window_bounds = array<i64: 162, 84>}, {pipeline_mode = #tpu.pipeline_mode<synchronous>, transform_indices = @transform_5, window_bounds = array<i64: 5, 84, 160>}, {pipeline_mode = #tpu.pipeline_mode<synchronous>, transform_indices = @transform_6, window_bounds = array<i64: 1, 160>}, {pipeline_mode = #tpu.pipeline_mode<synchronous>, transform_indices = @transform_7, window_bounds = array<i64: 5, 9>}, {pipeline_mode = #tpu.pipeline_mode<synchronous>, transform_indices = @transform_8, window_bounds = array<i64: 144, 80>}, {pipeline_mode = #tpu.pipeline_mode<synchronous>, transform_indices = @transform_9, window_bounds = array<i64: 5, 80, 120>}, {pipeline_mode = #tpu.pipeline_mode<synchronous>, transform_indices = @transform_10, window_bounds = array<i64: 1, 120>}, {pipeline_mode = #tpu.pipeline_mode<synchronous>, transform_indices = @transform_11, window_bounds = array<i64: 120, 128>}, {pipeline_mode = #tpu.pipeline_mode<synchronous>, transform_indices = @transform_12, window_bounds = array<i64: 1, 128>}, {pipeline_mode = #tpu.pipeline_mode<synchronous>, transform_indices = @transform_13, window_bounds = array<i64: 128, 128>}, {pipeline_mode = #tpu.pipeline_mode<synchronous>, transform_indices = @transform_14, window_bounds = array<i64: 1, 128>}, {transform_indices = @transform_15, window_bounds = array<i64: 1, 1, 128>}]} {
    %c0 = arith.constant 0 : index
    %c0_0 = arith.constant 0 : index
    %c0_1 = arith.constant 0 : index
    %0 = vector.load %arg1[%c0, %c0_0, %c0_1] : memref<1x32x32xf32, #tpu.memory_space<vmem>>, vector<1x32x32xf32>
    %1 = vector.shape_cast %0 : vector<1x32x32xf32> to vector<32x32xf32>
    %2 = vector.extract_strided_slice %1 {offsets = [0, 0], sizes = [28, 32], strides = [1, 1]} : vector<32x32xf32> to vector<28x32xf32>
    %3 = arith.truncf %2 : vector<28x32xf32> to vector<28x32xbf16>
    %c0_2 = arith.constant 0 : index
    %c0_3 = arith.constant 0 : index
    %c0_4 = arith.constant 0 : index
    %4 = vector.load %arg2[%c0_2, %c0_3, %c0_4] : memref<5x32x168xbf16, #tpu.memory_space<vmem>>, vector<1x32x168xbf16>
    %5 = vector.shape_cast %4 : vector<1x32x168xbf16> to vector<32x168xbf16>
    %cst = arith.constant dense<0.000000e+00> : vector<28x168xf32>
    %6 = tpu.matmul %3, %5, %cst {dimension_numbers = #tpu.dot_dimension_numbers<[1], [0], [0], [1], [0, 0, 1, 1], [], []>} : vector<28x32xbf16>, vector<32x168xbf16>, vector<28x168xf32> -> vector<28x168xf32>
    %7 = vector.extract_strided_slice %1 {offsets = [1, 0], sizes = [28, 32], strides = [1, 1]} : vector<32x32xf32> to vector<28x32xf32>
    %8 = arith.truncf %7 : vector<28x32xf32> to vector<28x32xbf16>
    %c1 = arith.constant 1 : index
    %c0_5 = arith.constant 0 : index
    %c0_6 = arith.constant 0 : index
    %9 = vector.load %arg2[%c1, %c0_5, %c0_6] : memref<5x32x168xbf16, #tpu.memory_space<vmem>>, vector<1x32x168xbf16>
    %10 = vector.shape_cast %9 : vector<1x32x168xbf16> to vector<32x168xbf16>
    %cst_7 = arith.constant dense<0.000000e+00> : vector<28x168xf32>
    %11 = tpu.matmul %8, %10, %cst_7 {dimension_numbers = #tpu.dot_dimension_numbers<[1], [0], [0], [1], [0, 0, 1, 1], [], []>} : vector<28x32xbf16>, vector<32x168xbf16>, vector<28x168xf32> -> vector<28x168xf32>
    %12 = arith.addf %6, %11 : vector<28x168xf32>
    %13 = vector.extract_strided_slice %1 {offsets = [2, 0], sizes = [28, 32], strides = [1, 1]} : vector<32x32xf32> to vector<28x32xf32>
    %14 = arith.truncf %13 : vector<28x32xf32> to vector<28x32xbf16>
    %c2 = arith.constant 2 : index
    %c0_8 = arith.constant 0 : index
    %c0_9 = arith.constant 0 : index
    %15 = vector.load %arg2[%c2, %c0_8, %c0_9] : memref<5x32x168xbf16, #tpu.memory_space<vmem>>, vector<1x32x168xbf16>
    %16 = vector.shape_cast %15 : vector<1x32x168xbf16> to vector<32x168xbf16>
    %cst_10 = arith.constant dense<0.000000e+00> : vector<28x168xf32>
    %17 = tpu.matmul %14, %16, %cst_10 {dimension_numbers = #tpu.dot_dimension_numbers<[1], [0], [0], [1], [0, 0, 1, 1], [], []>} : vector<28x32xbf16>, vector<32x168xbf16>, vector<28x168xf32> -> vector<28x168xf32>
    %18 = arith.addf %12, %17 : vector<28x168xf32>
    %19 = vector.extract_strided_slice %1 {offsets = [3, 0], sizes = [28, 32], strides = [1, 1]} : vector<32x32xf32> to vector<28x32xf32>
    %20 = arith.truncf %19 : vector<28x32xf32> to vector<28x32xbf16>
    %c3 = arith.constant 3 : index
    %c0_11 = arith.constant 0 : index
    %c0_12 = arith.constant 0 : index
    %21 = vector.load %arg2[%c3, %c0_11, %c0_12] : memref<5x32x168xbf16, #tpu.memory_space<vmem>>, vector<1x32x168xbf16>
    %22 = vector.shape_cast %21 : vector<1x32x168xbf16> to vector<32x168xbf16>
    %cst_13 = arith.constant dense<0.000000e+00> : vector<28x168xf32>
    %23 = tpu.matmul %20, %22, %cst_13 {dimension_numbers = #tpu.dot_dimension_numbers<[1], [0], [0], [1], [0, 0, 1, 1], [], []>} : vector<28x32xbf16>, vector<32x168xbf16>, vector<28x168xf32> -> vector<28x168xf32>
    %24 = arith.addf %18, %23 : vector<28x168xf32>
    %25 = vector.extract_strided_slice %1 {offsets = [4, 0], sizes = [28, 32], strides = [1, 1]} : vector<32x32xf32> to vector<28x32xf32>
    %26 = arith.truncf %25 : vector<28x32xf32> to vector<28x32xbf16>
    %c4 = arith.constant 4 : index
    %c0_14 = arith.constant 0 : index
    %c0_15 = arith.constant 0 : index
    %27 = vector.load %arg2[%c4, %c0_14, %c0_15] : memref<5x32x168xbf16, #tpu.memory_space<vmem>>, vector<1x32x168xbf16>
    %28 = vector.shape_cast %27 : vector<1x32x168xbf16> to vector<32x168xbf16>
    %cst_16 = arith.constant dense<0.000000e+00> : vector<28x168xf32>
    %29 = tpu.matmul %26, %28, %cst_16 {dimension_numbers = #tpu.dot_dimension_numbers<[1], [0], [0], [1], [0, 0, 1, 1], [], []>} : vector<28x32xbf16>, vector<32x168xbf16>, vector<28x168xf32> -> vector<28x168xf32>
    %30 = arith.addf %24, %29 : vector<28x168xf32>
    %c0_17 = arith.constant 0 : index
    %c0_18 = arith.constant 0 : index
    %31 = vector.load %arg3[%c0_17, %c0_18] : memref<1x168xf32, #tpu.memory_space<vmem>>, vector<1x168xf32>
    %32 = vector.broadcast %31 : vector<1x168xf32> to vector<28x168xf32>
    %33 = arith.addf %30, %32 : vector<28x168xf32>
    %cst_19 = arith.constant 0.000000e+00 : f32
    %34 = vector.broadcast %cst_19 : f32 to vector<28x168xf32>
    %35 = arith.maximumf %33, %34 : vector<28x168xf32>
    %36 = vector.extract_strided_slice %35 {offsets = [0, 0], sizes = [27, 168], strides = [1, 1]} : vector<28x168xf32> to vector<27x168xf32>
    %37 = vector.extract_strided_slice %35 {offsets = [1, 0], sizes = [27, 168], strides = [1, 1]} : vector<28x168xf32> to vector<27x168xf32>
    %38 = arith.maximumf %36, %37 : vector<27x168xf32>
    %39 = vector.extract_strided_slice %38 {offsets = [0, 0], sizes = [27, 162], strides = [1, 1]} : vector<27x168xf32> to vector<27x162xf32>
    %40 = vector.extract_strided_slice %38 {offsets = [0, 6], sizes = [27, 162], strides = [1, 1]} : vector<27x168xf32> to vector<27x162xf32>
    %41 = arith.maximumf %39, %40 : vector<27x162xf32>
    %42 = arith.truncf %41 : vector<27x162xf32> to vector<27x162xbf16>
    %c0_20 = arith.constant 0 : index
    %c0_21 = arith.constant 0 : index
    %43 = vector.load %arg4[%c0_20, %c0_21] : memref<14x27xbf16, #tpu.memory_space<vmem>>, vector<14x27xbf16>
    %cst_22 = arith.constant dense<0.000000e+00> : vector<14x162xf32>
    %44 = tpu.matmul %43, %42, %cst_22 {dimension_numbers = #tpu.dot_dimension_numbers<[1], [0], [0], [1], [0, 0, 1, 1], [], []>} : vector<14x27xbf16>, vector<27x162xbf16>, vector<14x162xf32> -> vector<14x162xf32>
    %45 = arith.truncf %44 : vector<14x162xf32> to vector<14x162xbf16>
    %c0_23 = arith.constant 0 : index
    %c0_24 = arith.constant 0 : index
    %46 = vector.load %arg5[%c0_23, %c0_24] : memref<162x84xbf16, #tpu.memory_space<vmem>>, vector<162x84xbf16>
    %cst_25 = arith.constant dense<0.000000e+00> : vector<14x84xf32>
    %47 = tpu.matmul %45, %46, %cst_25 {dimension_numbers = #tpu.dot_dimension_numbers<[1], [0], [0], [1], [0, 0, 1, 1], [], []>} : vector<14x162xbf16>, vector<162x84xbf16>, vector<14x84xf32> -> vector<14x84xf32>
    %48 = vector.extract_strided_slice %47 {offsets = [0, 0], sizes = [10, 84], strides = [1, 1]} : vector<14x84xf32> to vector<10x84xf32>
    %49 = arith.truncf %48 : vector<10x84xf32> to vector<10x84xbf16>
    %c0_26 = arith.constant 0 : index
    %c0_27 = arith.constant 0 : index
    %c0_28 = arith.constant 0 : index
    %50 = vector.load %arg6[%c0_26, %c0_27, %c0_28] : memref<5x84x160xbf16, #tpu.memory_space<vmem>>, vector<1x84x160xbf16>
    %51 = vector.shape_cast %50 : vector<1x84x160xbf16> to vector<84x160xbf16>
    %cst_29 = arith.constant dense<0.000000e+00> : vector<10x160xf32>
    %52 = tpu.matmul %49, %51, %cst_29 {dimension_numbers = #tpu.dot_dimension_numbers<[1], [0], [0], [1], [0, 0, 1, 1], [], []>} : vector<10x84xbf16>, vector<84x160xbf16>, vector<10x160xf32> -> vector<10x160xf32>
    %53 = vector.extract_strided_slice %47 {offsets = [1, 0], sizes = [10, 84], strides = [1, 1]} : vector<14x84xf32> to vector<10x84xf32>
    %54 = arith.truncf %53 : vector<10x84xf32> to vector<10x84xbf16>
    %c1_30 = arith.constant 1 : index
    %c0_31 = arith.constant 0 : index
    %c0_32 = arith.constant 0 : index
    %55 = vector.load %arg6[%c1_30, %c0_31, %c0_32] : memref<5x84x160xbf16, #tpu.memory_space<vmem>>, vector<1x84x160xbf16>
    %56 = vector.shape_cast %55 : vector<1x84x160xbf16> to vector<84x160xbf16>
    %cst_33 = arith.constant dense<0.000000e+00> : vector<10x160xf32>
    %57 = tpu.matmul %54, %56, %cst_33 {dimension_numbers = #tpu.dot_dimension_numbers<[1], [0], [0], [1], [0, 0, 1, 1], [], []>} : vector<10x84xbf16>, vector<84x160xbf16>, vector<10x160xf32> -> vector<10x160xf32>
    %58 = arith.addf %52, %57 : vector<10x160xf32>
    %59 = vector.extract_strided_slice %47 {offsets = [2, 0], sizes = [10, 84], strides = [1, 1]} : vector<14x84xf32> to vector<10x84xf32>
    %60 = arith.truncf %59 : vector<10x84xf32> to vector<10x84xbf16>
    %c2_34 = arith.constant 2 : index
    %c0_35 = arith.constant 0 : index
    %c0_36 = arith.constant 0 : index
    %61 = vector.load %arg6[%c2_34, %c0_35, %c0_36] : memref<5x84x160xbf16, #tpu.memory_space<vmem>>, vector<1x84x160xbf16>
    %62 = vector.shape_cast %61 : vector<1x84x160xbf16> to vector<84x160xbf16>
    %cst_37 = arith.constant dense<0.000000e+00> : vector<10x160xf32>
    %63 = tpu.matmul %60, %62, %cst_37 {dimension_numbers = #tpu.dot_dimension_numbers<[1], [0], [0], [1], [0, 0, 1, 1], [], []>} : vector<10x84xbf16>, vector<84x160xbf16>, vector<10x160xf32> -> vector<10x160xf32>
    %64 = arith.addf %58, %63 : vector<10x160xf32>
    %65 = vector.extract_strided_slice %47 {offsets = [3, 0], sizes = [10, 84], strides = [1, 1]} : vector<14x84xf32> to vector<10x84xf32>
    %66 = arith.truncf %65 : vector<10x84xf32> to vector<10x84xbf16>
    %c3_38 = arith.constant 3 : index
    %c0_39 = arith.constant 0 : index
    %c0_40 = arith.constant 0 : index
    %67 = vector.load %arg6[%c3_38, %c0_39, %c0_40] : memref<5x84x160xbf16, #tpu.memory_space<vmem>>, vector<1x84x160xbf16>
    %68 = vector.shape_cast %67 : vector<1x84x160xbf16> to vector<84x160xbf16>
    %cst_41 = arith.constant dense<0.000000e+00> : vector<10x160xf32>
    %69 = tpu.matmul %66, %68, %cst_41 {dimension_numbers = #tpu.dot_dimension_numbers<[1], [0], [0], [1], [0, 0, 1, 1], [], []>} : vector<10x84xbf16>, vector<84x160xbf16>, vector<10x160xf32> -> vector<10x160xf32>
    %70 = arith.addf %64, %69 : vector<10x160xf32>
    %71 = vector.extract_strided_slice %47 {offsets = [4, 0], sizes = [10, 84], strides = [1, 1]} : vector<14x84xf32> to vector<10x84xf32>
    %72 = arith.truncf %71 : vector<10x84xf32> to vector<10x84xbf16>
    %c4_42 = arith.constant 4 : index
    %c0_43 = arith.constant 0 : index
    %c0_44 = arith.constant 0 : index
    %73 = vector.load %arg6[%c4_42, %c0_43, %c0_44] : memref<5x84x160xbf16, #tpu.memory_space<vmem>>, vector<1x84x160xbf16>
    %74 = vector.shape_cast %73 : vector<1x84x160xbf16> to vector<84x160xbf16>
    %cst_45 = arith.constant dense<0.000000e+00> : vector<10x160xf32>
    %75 = tpu.matmul %72, %74, %cst_45 {dimension_numbers = #tpu.dot_dimension_numbers<[1], [0], [0], [1], [0, 0, 1, 1], [], []>} : vector<10x84xbf16>, vector<84x160xbf16>, vector<10x160xf32> -> vector<10x160xf32>
    %76 = arith.addf %70, %75 : vector<10x160xf32>
    %c0_46 = arith.constant 0 : index
    %c0_47 = arith.constant 0 : index
    %77 = vector.load %arg7[%c0_46, %c0_47] : memref<1x160xf32, #tpu.memory_space<vmem>>, vector<1x160xf32>
    %78 = vector.broadcast %77 : vector<1x160xf32> to vector<10x160xf32>
    %79 = arith.addf %76, %78 : vector<10x160xf32>
    %cst_48 = arith.constant 0.000000e+00 : f32
    %80 = vector.broadcast %cst_48 : f32 to vector<10x160xf32>
    %81 = arith.maximumf %79, %80 : vector<10x160xf32>
    %82 = vector.extract_strided_slice %81 {offsets = [0, 0], sizes = [9, 160], strides = [1, 1]} : vector<10x160xf32> to vector<9x160xf32>
    %83 = vector.extract_strided_slice %81 {offsets = [1, 0], sizes = [9, 160], strides = [1, 1]} : vector<10x160xf32> to vector<9x160xf32>
    %84 = arith.maximumf %82, %83 : vector<9x160xf32>
    %85 = vector.extract_strided_slice %84 {offsets = [0, 0], sizes = [9, 144], strides = [1, 1]} : vector<9x160xf32> to vector<9x144xf32>
    %86 = vector.extract_strided_slice %84 {offsets = [0, 16], sizes = [9, 144], strides = [1, 1]} : vector<9x160xf32> to vector<9x144xf32>
    %87 = arith.maximumf %85, %86 : vector<9x144xf32>
    %88 = arith.truncf %87 : vector<9x144xf32> to vector<9x144xbf16>
    %c0_49 = arith.constant 0 : index
    %c0_50 = arith.constant 0 : index
    %89 = vector.load %arg8[%c0_49, %c0_50] : memref<5x9xbf16, #tpu.memory_space<vmem>>, vector<5x9xbf16>
    %cst_51 = arith.constant dense<0.000000e+00> : vector<5x144xf32>
    %90 = tpu.matmul %89, %88, %cst_51 {dimension_numbers = #tpu.dot_dimension_numbers<[1], [0], [0], [1], [0, 0, 1, 1], [], []>} : vector<5x9xbf16>, vector<9x144xbf16>, vector<5x144xf32> -> vector<5x144xf32>
    %91 = arith.truncf %90 : vector<5x144xf32> to vector<5x144xbf16>
    %c0_52 = arith.constant 0 : index
    %c0_53 = arith.constant 0 : index
    %92 = vector.load %arg9[%c0_52, %c0_53] : memref<144x80xbf16, #tpu.memory_space<vmem>>, vector<144x80xbf16>
    %cst_54 = arith.constant dense<0.000000e+00> : vector<5x80xf32>
    %93 = tpu.matmul %91, %92, %cst_54 {dimension_numbers = #tpu.dot_dimension_numbers<[1], [0], [0], [1], [0, 0, 1, 1], [], []>} : vector<5x144xbf16>, vector<144x80xbf16>, vector<5x80xf32> -> vector<5x80xf32>
    %94 = vector.extract_strided_slice %93 {offsets = [0, 0], sizes = [1, 80], strides = [1, 1]} : vector<5x80xf32> to vector<1x80xf32>
    %95 = arith.truncf %94 : vector<1x80xf32> to vector<1x80xbf16>
    %c0_55 = arith.constant 0 : index
    %c0_56 = arith.constant 0 : index
    %c0_57 = arith.constant 0 : index
    %96 = vector.load %arg10[%c0_55, %c0_56, %c0_57] : memref<5x80x120xbf16, #tpu.memory_space<vmem>>, vector<1x80x120xbf16>
    %97 = vector.shape_cast %96 : vector<1x80x120xbf16> to vector<80x120xbf16>
    %cst_58 = arith.constant dense<0.000000e+00> : vector<1x120xf32>
    %98 = tpu.matmul %95, %97, %cst_58 {dimension_numbers = #tpu.dot_dimension_numbers<[1], [0], [0], [1], [0, 0, 1, 1], [], []>} : vector<1x80xbf16>, vector<80x120xbf16>, vector<1x120xf32> -> vector<1x120xf32>
    %99 = vector.extract_strided_slice %93 {offsets = [1, 0], sizes = [1, 80], strides = [1, 1]} : vector<5x80xf32> to vector<1x80xf32>
    %100 = arith.truncf %99 : vector<1x80xf32> to vector<1x80xbf16>
    %c1_59 = arith.constant 1 : index
    %c0_60 = arith.constant 0 : index
    %c0_61 = arith.constant 0 : index
    %101 = vector.load %arg10[%c1_59, %c0_60, %c0_61] : memref<5x80x120xbf16, #tpu.memory_space<vmem>>, vector<1x80x120xbf16>
    %102 = vector.shape_cast %101 : vector<1x80x120xbf16> to vector<80x120xbf16>
    %cst_62 = arith.constant dense<0.000000e+00> : vector<1x120xf32>
    %103 = tpu.matmul %100, %102, %cst_62 {dimension_numbers = #tpu.dot_dimension_numbers<[1], [0], [0], [1], [0, 0, 1, 1], [], []>} : vector<1x80xbf16>, vector<80x120xbf16>, vector<1x120xf32> -> vector<1x120xf32>
    %104 = arith.addf %98, %103 : vector<1x120xf32>
    %105 = vector.extract_strided_slice %93 {offsets = [2, 0], sizes = [1, 80], strides = [1, 1]} : vector<5x80xf32> to vector<1x80xf32>
    %106 = arith.truncf %105 : vector<1x80xf32> to vector<1x80xbf16>
    %c2_63 = arith.constant 2 : index
    %c0_64 = arith.constant 0 : index
    %c0_65 = arith.constant 0 : index
    %107 = vector.load %arg10[%c2_63, %c0_64, %c0_65] : memref<5x80x120xbf16, #tpu.memory_space<vmem>>, vector<1x80x120xbf16>
    %108 = vector.shape_cast %107 : vector<1x80x120xbf16> to vector<80x120xbf16>
    %cst_66 = arith.constant dense<0.000000e+00> : vector<1x120xf32>
    %109 = tpu.matmul %106, %108, %cst_66 {dimension_numbers = #tpu.dot_dimension_numbers<[1], [0], [0], [1], [0, 0, 1, 1], [], []>} : vector<1x80xbf16>, vector<80x120xbf16>, vector<1x120xf32> -> vector<1x120xf32>
    %110 = arith.addf %104, %109 : vector<1x120xf32>
    %111 = vector.extract_strided_slice %93 {offsets = [3, 0], sizes = [1, 80], strides = [1, 1]} : vector<5x80xf32> to vector<1x80xf32>
    %112 = arith.truncf %111 : vector<1x80xf32> to vector<1x80xbf16>
    %c3_67 = arith.constant 3 : index
    %c0_68 = arith.constant 0 : index
    %c0_69 = arith.constant 0 : index
    %113 = vector.load %arg10[%c3_67, %c0_68, %c0_69] : memref<5x80x120xbf16, #tpu.memory_space<vmem>>, vector<1x80x120xbf16>
    %114 = vector.shape_cast %113 : vector<1x80x120xbf16> to vector<80x120xbf16>
    %cst_70 = arith.constant dense<0.000000e+00> : vector<1x120xf32>
    %115 = tpu.matmul %112, %114, %cst_70 {dimension_numbers = #tpu.dot_dimension_numbers<[1], [0], [0], [1], [0, 0, 1, 1], [], []>} : vector<1x80xbf16>, vector<80x120xbf16>, vector<1x120xf32> -> vector<1x120xf32>
    %116 = arith.addf %110, %115 : vector<1x120xf32>
    %117 = vector.extract_strided_slice %93 {offsets = [4, 0], sizes = [1, 80], strides = [1, 1]} : vector<5x80xf32> to vector<1x80xf32>
    %118 = arith.truncf %117 : vector<1x80xf32> to vector<1x80xbf16>
    %c4_71 = arith.constant 4 : index
    %c0_72 = arith.constant 0 : index
    %c0_73 = arith.constant 0 : index
    %119 = vector.load %arg10[%c4_71, %c0_72, %c0_73] : memref<5x80x120xbf16, #tpu.memory_space<vmem>>, vector<1x80x120xbf16>
    %120 = vector.shape_cast %119 : vector<1x80x120xbf16> to vector<80x120xbf16>
    %cst_74 = arith.constant dense<0.000000e+00> : vector<1x120xf32>
    %121 = tpu.matmul %118, %120, %cst_74 {dimension_numbers = #tpu.dot_dimension_numbers<[1], [0], [0], [1], [0, 0, 1, 1], [], []>} : vector<1x80xbf16>, vector<80x120xbf16>, vector<1x120xf32> -> vector<1x120xf32>
    %122 = arith.addf %116, %121 : vector<1x120xf32>
    %c0_75 = arith.constant 0 : index
    %c0_76 = arith.constant 0 : index
    %123 = vector.load %arg11[%c0_75, %c0_76] : memref<1x120xf32, #tpu.memory_space<vmem>>, vector<1x120xf32>
    %124 = arith.addf %122, %123 : vector<1x120xf32>
    %cst_77 = arith.constant 0.000000e+00 : f32
    %125 = vector.broadcast %cst_77 : f32 to vector<1x120xf32>
    %126 = arith.maximumf %124, %125 : vector<1x120xf32>
    %127 = arith.truncf %126 : vector<1x120xf32> to vector<1x120xbf16>
    %c0_78 = arith.constant 0 : index
    %c0_79 = arith.constant 0 : index
    %128 = vector.load %arg12[%c0_78, %c0_79] : memref<120x128xbf16, #tpu.memory_space<vmem>>, vector<120x128xbf16>
    %cst_80 = arith.constant dense<0.000000e+00> : vector<1x128xf32>
    %129 = tpu.matmul %127, %128, %cst_80 {dimension_numbers = #tpu.dot_dimension_numbers<[1], [0], [0], [1], [0, 0, 1, 1], [], []>} : vector<1x120xbf16>, vector<120x128xbf16>, vector<1x128xf32> -> vector<1x128xf32>
    %c0_81 = arith.constant 0 : index
    %c0_82 = arith.constant 0 : index
    %130 = vector.load %arg13[%c0_81, %c0_82] : memref<1x128xf32, #tpu.memory_space<vmem>>, vector<1x128xf32>
    %131 = arith.addf %129, %130 : vector<1x128xf32>
    %cst_83 = arith.constant 0.000000e+00 : f32
    %132 = vector.broadcast %cst_83 : f32 to vector<1x128xf32>
    %133 = arith.maximumf %131, %132 : vector<1x128xf32>
    %134 = arith.truncf %133 : vector<1x128xf32> to vector<1x128xbf16>
    %c0_84 = arith.constant 0 : index
    %c0_85 = arith.constant 0 : index
    %135 = vector.load %arg14[%c0_84, %c0_85] : memref<128x128xbf16, #tpu.memory_space<vmem>>, vector<128x128xbf16>
    %cst_86 = arith.constant dense<0.000000e+00> : vector<1x128xf32>
    %136 = tpu.matmul %134, %135, %cst_86 {dimension_numbers = #tpu.dot_dimension_numbers<[1], [0], [0], [1], [0, 0, 1, 1], [], []>} : vector<1x128xbf16>, vector<128x128xbf16>, vector<1x128xf32> -> vector<1x128xf32>
    %c0_87 = arith.constant 0 : index
    %c0_88 = arith.constant 0 : index
    %137 = vector.load %arg15[%c0_87, %c0_88] : memref<1x128xf32, #tpu.memory_space<vmem>>, vector<1x128xf32>
    %138 = arith.addf %136, %137 : vector<1x128xf32>
    %cst_89 = arith.constant 0.000000e+00 : f32
    %139 = vector.broadcast %cst_89 : f32 to vector<1x128xf32>
    %140 = arith.maximumf %138, %139 : vector<1x128xf32>
    %c0_90 = arith.constant 0 : index
    %c0_91 = arith.constant 0 : index
    %c0_92 = arith.constant 0 : index
    %141 = vector.load %arg16[%c0_90, %c0_91, %c0_92] : memref<1x1x128xf32, #tpu.memory_space<vmem>>, vector<1x1x128xf32>
    %142 = vector.shape_cast %141 : vector<1x1x128xf32> to vector<1x128xf32>
    %143 = vector.shape_cast %140 : vector<1x128xf32> to vector<1x1x128xf32>
    tpu.vector_store %arg16[%c0_90, %c0_91, %c0_92], %143 {strides = array<i32>} : memref<1x1x128xf32, #tpu.memory_space<vmem>>, vector<1x1x128xf32>,
    return
  }
  func.func @transform_0(%arg0: i32) -> (i32, i32, i32) {
    %c0_i32 = arith.constant 0 : i32
    %c0_i32_0 = arith.constant 0 : i32
    %c0_i32_1 = arith.constant 0 : i32
    return %arg0, %c0_i32, %c0_i32_0 : i32, i32, i32
  }
  func.func @transform_1(%arg0: i32) -> (i32, i32, i32) {
    %c0_i32 = arith.constant 0 : i32
    %c0_i32_0 = arith.constant 0 : i32
    %c0_i32_1 = arith.constant 0 : i32
    %c0_i32_2 = arith.constant 0 : i32
    return %c0_i32, %c0_i32_0, %c0_i32_1 : i32, i32, i32
  }
  func.func @transform_2(%arg0: i32) -> (i32, i32) {
    %c0_i32 = arith.constant 0 : i32
    %c0_i32_0 = arith.constant 0 : i32
    %c0_i32_1 = arith.constant 0 : i32
    return %c0_i32, %c0_i32_0 : i32, i32
  }
  func.func @transform_3(%arg0: i32) -> (i32, i32) {
    %c0_i32 = arith.constant 0 : i32
    %c0_i32_0 = arith.constant 0 : i32
    %c0_i32_1 = arith.constant 0 : i32
    return %c0_i32, %c0_i32_0 : i32, i32
  }
  func.func @transform_4(%arg0: i32) -> (i32, i32) {
    %c0_i32 = arith.constant 0 : i32
    %c0_i32_0 = arith.constant 0 : i32
    %c0_i32_1 = arith.constant 0 : i32
    return %c0_i32, %c0_i32_0 : i32, i32
  }
  func.func @transform_5(%arg0: i32) -> (i32, i32, i32) {
    %c0_i32 = arith.constant 0 : i32
    %c0_i32_0 = arith.constant 0 : i32
    %c0_i32_1 = arith.constant 0 : i32
    %c0_i32_2 = arith.constant 0 : i32
    return %c0_i32, %c0_i32_0, %c0_i32_1 : i32, i32, i32
  }
  func.func @transform_6(%arg0: i32) -> (i32, i32) {
    %c0_i32 = arith.constant 0 : i32
    %c0_i32_0 = arith.constant 0 : i32
    %c0_i32_1 = arith.constant 0 : i32
    return %c0_i32, %c0_i32_0 : i32, i32
  }
  func.func @transform_7(%arg0: i32) -> (i32, i32) {
    %c0_i32 = arith.constant 0 : i32
    %c0_i32_0 = arith.constant 0 : i32
    %c0_i32_1 = arith.constant 0 : i32
    return %c0_i32, %c0_i32_0 : i32, i32
  }
  func.func @transform_8(%arg0: i32) -> (i32, i32) {
    %c0_i32 = arith.constant 0 : i32
    %c0_i32_0 = arith.constant 0 : i32
    %c0_i32_1 = arith.constant 0 : i32
    return %c0_i32, %c0_i32_0 : i32, i32
  }
  func.func @transform_9(%arg0: i32) -> (i32, i32, i32) {
    %c0_i32 = arith.constant 0 : i32
    %c0_i32_0 = arith.constant 0 : i32
    %c0_i32_1 = arith.constant 0 : i32
    %c0_i32_2 = arith.constant 0 : i32
    return %c0_i32, %c0_i32_0, %c0_i32_1 : i32, i32, i32
  }
  func.func @transform_10(%arg0: i32) -> (i32, i32) {
    %c0_i32 = arith.constant 0 : i32
    %c0_i32_0 = arith.constant 0 : i32
    %c0_i32_1 = arith.constant 0 : i32
    return %c0_i32, %c0_i32_0 : i32, i32
  }
  func.func @transform_11(%arg0: i32) -> (i32, i32) {
    %c0_i32 = arith.constant 0 : i32
    %c0_i32_0 = arith.constant 0 : i32
    %c0_i32_1 = arith.constant 0 : i32
    return %c0_i32, %c0_i32_0 : i32, i32
  }
  func.func @transform_12(%arg0: i32) -> (i32, i32) {
    %c0_i32 = arith.constant 0 : i32
    %c0_i32_0 = arith.constant 0 : i32
    %c0_i32_1 = arith.constant 0 : i32
    return %c0_i32, %c0_i32_0 : i32, i32
  }
  func.func @transform_13(%arg0: i32) -> (i32, i32) {
    %c0_i32 = arith.constant 0 : i32
    %c0_i32_0 = arith.constant 0 : i32
    %c0_i32_1 = arith.constant 0 : i32
    return %c0_i32, %c0_i32_0 : i32, i32
  }
  func.func @transform_14(%arg0: i32) -> (i32, i32) {
    %c0_i32 = arith.constant 0 : i32
    %c0_i32_0 = arith.constant 0 : i32
    %c0_i32_1 = arith.constant 0 : i32
    return %c0_i32, %c0_i32_0 : i32, i32
  }
  func.func @transform_15(%arg0: i32) -> (i32, i32, i32) {
    %c0_i32 = arith.constant 0 : i32
    %c0_i32_0 = arith.constant 0 : i32
    %c0_i32_1 = arith.constant 0 : i32
    return %arg0, %c0_i32, %c0_i32_0 : i32, i32, i32
  }
}

</mosaic_0001>

<llo_original>
// kernel: lenet5_forward.1
$region0: #{lenet5_forward.1}
  #allocation0 [shape = 'u32[]', space=smem, size = 0x4, offset = 0x4, fixed_abs, tag = 'smem constant byte address 0x4 - core index']
  #allocation1 [shape = 'u32[144,128]{1,0:T(1,128)}', space=vmem, size = 0x12000, scoped, tag = 'internal scratch']
  %s0 = inlined_call_operand.vmem [shape: f32[2,32,32], index: 0, kind: input, shape index: {}]
  %s1 = inlined_call_operand.vmem [shape: bf16[5,32,168], index: 1, kind: input, shape index: {}]
  %s2 = inlined_call_operand.vmem [shape: f32[1,168], index: 2, kind: input, shape index: {}]
  %s3 = inlined_call_operand.vmem [shape: bf16[14,27], index: 3, kind: input, shape index: {}]
  %s4 = inlined_call_operand.vmem [shape: bf16[162,84], index: 4, kind: input, shape index: {}]
  %s5 = inlined_call_operand.vmem [shape: bf16[5,84,160], index: 5, kind: input, shape index: {}]
  %s6 = inlined_call_operand.vmem [shape: f32[1,160], index: 6, kind: input, shape index: {}]
  %s7 = inlined_call_operand.vmem [shape: bf16[5,9], index: 7, kind: input, shape index: {}]
  %s8 = inlined_call_operand.vmem [shape: bf16[144,80], index: 8, kind: input, shape index: {}]
  %s9 = inlined_call_operand.vmem [shape: bf16[5,80,120], index: 9, kind: input, shape index: {}]
  %s10 = inlined_call_operand.vmem [shape: f32[1,120], index: 10, kind: input, shape index: {}]
  %s11 = inlined_call_operand.vmem [shape: bf16[120,128], index: 11, kind: input, shape index: {}]
  %s12 = inlined_call_operand.vmem [shape: f32[1,128], index: 12, kind: input, shape index: {}]
  %s13 = inlined_call_operand.vmem [shape: bf16[128,128], index: 13, kind: input, shape index: {}]
  %s14 = inlined_call_operand.vmem [shape: f32[1,128], index: 14, kind: input, shape index: {}]
  %s15 = inlined_call_operand.hbm [shape: f32[2,1,128], index: 15, kind: output, shape index: {}]
  %s16 = sld [smem:[#allocation0]]
  $region93: #{lenet5_forward.1} parent=0
    _
  %s18 = ssub.s32 1, %s16
  %s19 = scalar_select 0, %s18, %s16
  $region1: #{lenet5_forward.1} parent=0
    #allocation2 [shape = 'u8[1024]{0}', space=vmem, size = 0x400, scoped, tag = 'output window, operand 0']
    #allocation3 [shape = 's32[2]{0}', space=sflag, size = 0x8, scoped, tag = 'scoped memory for lenet5_forward.1']
    %20 = vsyncpa [#allocation3], 0
    %s21 = scalar_lea.sflag [#allocation3], 1
    %22 = vsyncpa %s21, 0
    loop: start=0, step=1, limit=4
    $region2: #{lenet5_forward.1} parent=1 // loop_pre_header
      _
    $region3: #{lenet5_forward.1} parent=1 // loop_header
      %s24 = sphi 0, %s28
      %p25 = scmp.ge.s32.totalorder %s24, 4
      %s34 = sphi 0, %s36
      %s37 = sphi 0, %s34
      %s38 = sphi 0, %s37
      %s54 = sphi 0, %s38
      %s58 = sphi 0, %s58
      %s60 = sphi 0, %s58
      %s61 = sphi 0, %s60
      %s75 = sphi 0, %s61
      %s79 = sphi 0, %s79
      %s81 = sphi 0, %s79
      %s82 = sphi 0, %s81
      %s96 = sphi 0, %s82
      %s100 = sphi 0, %s100
      %s102 = sphi 0, %s100
      %s103 = sphi 0, %s102
      %s117 = sphi 0, %s103
      %s121 = sphi 0, %s121
      %s123 = sphi 0, %s121
      %s124 = sphi 0, %s123
      %s138 = sphi 0, %s124
      %s142 = sphi 0, %s142
      %s144 = sphi 0, %s142
      %s145 = sphi 0, %s144
      %s159 = sphi 0, %s145
      %s163 = sphi 0, %s163
      %s165 = sphi 0, %s163
      %s166 = sphi 0, %s165
      %s180 = sphi 0, %s166
      %s184 = sphi 0, %s184
      %s186 = sphi 0, %s184
      %s187 = sphi 0, %s186
      %s201 = sphi 0, %s187
      %s205 = sphi 0, %s205
      %s207 = sphi 0, %s205
      %s208 = sphi 0, %s207
      %s222 = sphi 0, %s208
      %s226 = sphi 0, %s226
      %s228 = sphi 0, %s226
      %s229 = sphi 0, %s228
      %s243 = sphi 0, %s229
      %s247 = sphi 0, %s247
      %s249 = sphi 0, %s247
      %s250 = sphi 0, %s249
      %s264 = sphi 0, %s250
      %s268 = sphi 0, %s268
      %s270 = sphi 0, %s268
      %s271 = sphi 0, %s270
      %s285 = sphi 0, %s271
      %s289 = sphi 0, %s289
      %s291 = sphi 0, %s289
      %s292 = sphi 0, %s291
      %s306 = sphi 0, %s292
      %s310 = sphi 0, %s310
      %s312 = sphi 0, %s310
      %s313 = sphi 0, %s312
      %s327 = sphi 0, %s313
      %s331 = sphi 0, %s331
      %s333 = sphi 0, %s331
      %s334 = sphi 0, %s333
      %s348 = sphi 0, %s334
      %s354 = sphi 0, %s356
      %s357 = sphi 0, %s354
      %s358 = sphi 0, %s357
      %s374 = sphi 0, %s358
    $region4: #{lenet5_forward.1} parent=1 // loop_header_branch
      %27 = sbr.rel (%p25) target = $region8
    $region5: #{lenet5_forward.1} parent=1 // loop_body
      %s29 = ssub.s32 %s24, 1
      %s30 = ssub.s32 %s24, 2
      %s31 = sadd.s32 %s24, 1
      %s32 = ssub.s32 %s24, %s31
      %p33 = scmp.eq.s32.totalorder %s32, 0
      %s35 = sadd.s32 %s34, 1
      %s36 = scalar_select %p33, %s34, %s35
      %p39 = pneg %p33
      %p40 = scmp.eq.s32.totalorder %s24, 1
      %p41 = por %p39, %p40
      %p42 = scmp.ne.s32.totalorder %s34, %s37
      %p43 = scmp.eq.s32.totalorder %s24, 0
      %p44 = por %p42, %p43
      %p45 = scmp.ne.s32.totalorder %s34, %s37
      %p46 = scmp.eq.s32.totalorder %s29, 1
      %p47 = por %p45, %p46
      %p48 = scmp.ne.s32.totalorder %s37, %s38
      %p49 = scmp.eq.s32.totalorder %s29, 0
      %p50 = por %p48, %p49
      %p51 = scmp.ne.s32.totalorder %s37, %s38
      %p52 = scmp.eq.s32.totalorder %s30, 1
      %p53 = por %p51, %p52
      %p55 = scmp.ne.s32.totalorder %s38, %s54
      %p56 = scmp.eq.s32.totalorder %s30, 0
      %p57 = por %p55, %p56
      %s59 = sadd.s32 %s58, 1
      %p62 = scmp.eq.s32.totalorder %s24, 1
      %p63 = scmp.ne.s32.totalorder %s58, %s60
      %p64 = scmp.eq.s32.totalorder %s24, 0
      %p65 = por %p63, %p64
      %p66 = scmp.ne.s32.totalorder %s58, %s60
      %p67 = scmp.eq.s32.totalorder %s29, 1
      %p68 = por %p66, %p67
      %p69 = scmp.ne.s32.totalorder %s60, %s61
      %p70 = scmp.eq.s32.totalorder %s29, 0
      %p71 = por %p69, %p70
      %p72 = scmp.ne.s32.totalorder %s60, %s61
      %p73 = scmp.eq.s32.totalorder %s30, 1
      %p74 = por %p72, %p73
      %p76 = scmp.ne.s32.totalorder %s61, %s75
      %p77 = scmp.eq.s32.totalorder %s30, 0
      %p78 = por %p76, %p77
      %s80 = sadd.s32 %s79, 1
      %p83 = scmp.eq.s32.totalorder %s24, 1
      %p84 = scmp.ne.s32.totalorder %s79, %s81
      %p85 = scmp.eq.s32.totalorder %s24, 0
      %p86 = por %p84, %p85
      %p87 = scmp.ne.s32.totalorder %s79, %s81
      %p88 = scmp.eq.s32.totalorder %s29, 1
      %p89 = por %p87, %p88
      %p90 = scmp.ne.s32.totalorder %s81, %s82
      %p91 = scmp.eq.s32.totalorder %s29, 0
      %p92 = por %p90, %p91
      %p93 = scmp.ne.s32.totalorder %s81, %s82
      %p94 = scmp.eq.s32.totalorder %s30, 1
      %p95 = por %p93, %p94
      %p97 = scmp.ne.s32.totalorder %s82, %s96
      %p98 = scmp.eq.s32.totalorder %s30, 0
      %p99 = por %p97, %p98
      %s101 = sadd.s32 %s100, 1
      %p104 = scmp.eq.s32.totalorder %s24, 1
      %p105 = scmp.ne.s32.totalorder %s100, %s102
      %p106 = scmp.eq.s32.totalorder %s24, 0
      %p107 = por %p105, %p106
      %p108 = scmp.ne.s32.totalorder %s100, %s102
      %p109 = scmp.eq.s32.totalorder %s29, 1
      %p110 = por %p108, %p109
      %p111 = scmp.ne.s32.totalorder %s102, %s103
      %p112 = scmp.eq.s32.totalorder %s29, 0
      %p113 = por %p111, %p112
      %p114 = scmp.ne.s32.totalorder %s102, %s103
      %p115 = scmp.eq.s32.totalorder %s30, 1
      %p116 = por %p114, %p115
      %p118 = scmp.ne.s32.totalorder %s103, %s117
      %p119 = scmp.eq.s32.totalorder %s30, 0
      %p120 = por %p118, %p119
      %s122 = sadd.s32 %s121, 1
      %p125 = scmp.eq.s32.totalorder %s24, 1
      %p126 = scmp.ne.s32.totalorder %s121, %s123
      %p127 = scmp.eq.s32.totalorder %s24, 0
      %p128 = por %p126, %p127
      %p129 = scmp.ne.s32.totalorder %s121, %s123
      %p130 = scmp.eq.s32.totalorder %s29, 1
      %p131 = por %p129, %p130
      %p132 = scmp.ne.s32.totalorder %s123, %s124
      %p133 = scmp.eq.s32.totalorder %s29, 0
      %p134 = por %p132, %p133
      %p135 = scmp.ne.s32.totalorder %s123, %s124
      %p136 = scmp.eq.s32.totalorder %s30, 1
      %p137 = por %p135, %p136
      %p139 = scmp.ne.s32.totalorder %s124, %s138
      %p140 = scmp.eq.s32.totalorder %s30, 0
      %p141 = por %p139, %p140
      %s143 = sadd.s32 %s142, 1
      %p146 = scmp.eq.s32.totalorder %s24, 1
      %p147 = scmp.ne.s32.totalorder %s142, %s144
      %p148 = scmp.eq.s32.totalorder %s24, 0
      %p149 = por %p147, %p148
      %p150 = scmp.ne.s32.totalorder %s142, %s144
      %p151 = scmp.eq.s32.totalorder %s29, 1
      %p152 = por %p150, %p151
      %p153 = scmp.ne.s32.totalorder %s144, %s145
      %p154 = scmp.eq.s32.totalorder %s29, 0
      %p155 = por %p153, %p154
      %p156 = scmp.ne.s32.totalorder %s144, %s145
      %p157 = scmp.eq.s32.totalorder %s30, 1
      %p158 = por %p156, %p157
      %p160 = scmp.ne.s32.totalorder %s145, %s159
      %p161 = scmp.eq.s32.totalorder %s30, 0
      %p162 = por %p160, %p161
      %s164 = sadd.s32 %s163, 1
      %p167 = scmp.eq.s32.totalorder %s24, 1
      %p168 = scmp.ne.s32.totalorder %s163, %s165
      %p169 = scmp.eq.s32.totalorder %s24, 0
      %p170 = por %p168, %p169
      %p171 = scmp.ne.s32.totalorder %s163, %s165
      %p172 = scmp.eq.s32.totalorder %s29, 1
      %p173 = por %p171, %p172
      %p174 = scmp.ne.s32.totalorder %s165, %s166
      %p175 = scmp.eq.s32.totalorder %s29, 0
      %p176 = por %p174, %p175
      %p177 = scmp.ne.s32.totalorder %s165, %s166
      %p178 = scmp.eq.s32.totalorder %s30, 1
      %p179 = por %p177, %p178
      %p181 = scmp.ne.s32.totalorder %s166, %s180
      %p182 = scmp.eq.s32.totalorder %s30, 0
      %p183 = por %p181, %p182
      %s185 = sadd.s32 %s184, 1
      %p188 = scmp.eq.s32.totalorder %s24, 1
      %p189 = scmp.ne.s32.totalorder %s184, %s186
      %p190 = scmp.eq.s32.totalorder %s24, 0
      %p191 = por %p189, %p190
      %p192 = scmp.ne.s32.totalorder %s184, %s186
      %p193 = scmp.eq.s32.totalorder %s29, 1
      %p194 = por %p192, %p193
      %p195 = scmp.ne.s32.totalorder %s186, %s187
      %p196 = scmp.eq.s32.totalorder %s29, 0
      %p197 = por %p195, %p196
      %p198 = scmp.ne.s32.totalorder %s186, %s187
      %p199 = scmp.eq.s32.totalorder %s30, 1
      %p200 = por %p198, %p199
      %p202 = scmp.ne.s32.totalorder %s187, %s201
      %p203 = scmp.eq.s32.totalorder %s30, 0
      %p204 = por %p202, %p203
      %s206 = sadd.s32 %s205, 1
      %p209 = scmp.eq.s32.totalorder %s24, 1
      %p210 = scmp.ne.s32.totalorder %s205, %s207
      %p211 = scmp.eq.s32.totalorder %s24, 0
      %p212 = por %p210, %p211
      %p213 = scmp.ne.s32.totalorder %s205, %s207
      %p214 = scmp.eq.s32.totalorder %s29, 1
      %p215 = por %p213, %p214
      %p216 = scmp.ne.s32.totalorder %s207, %s208
      %p217 = scmp.eq.s32.totalorder %s29, 0
      %p218 = por %p216, %p217
      %p219 = scmp.ne.s32.totalorder %s207, %s208
      %p220 = scmp.eq.s32.totalorder %s30, 1
      %p221 = por %p219, %p220
      %p223 = scmp.ne.s32.totalorder %s208, %s222
      %p224 = scmp.eq.s32.totalorder %s30, 0
      %p225 = por %p223, %p224
      %s227 = sadd.s32 %s226, 1
      %p230 = scmp.eq.s32.totalorder %s24, 1
      %p231 = scmp.ne.s32.totalorder %s226, %s228
      %p232 = scmp.eq.s32.totalorder %s24, 0
      %p233 = por %p231, %p232
      %p234 = scmp.ne.s32.totalorder %s226, %s228
      %p235 = scmp.eq.s32.totalorder %s29, 1
      %p236 = por %p234, %p235
      %p237 = scmp.ne.s32.totalorder %s228, %s229
      %p238 = scmp.eq.s32.totalorder %s29, 0
      %p239 = por %p237, %p238
      %p240 = scmp.ne.s32.totalorder %s228, %s229
      %p241 = scmp.eq.s32.totalorder %s30, 1
      %p242 = por %p240, %p241
      %p244 = scmp.ne.s32.totalorder %s229, %s243
      %p245 = scmp.eq.s32.totalorder %s30, 0
      %p246 = por %p244, %p245
      %s248 = sadd.s32 %s247, 1
      %p251 = scmp.eq.s32.totalorder %s24, 1
      %p252 = scmp.ne.s32.totalorder %s247, %s249
      %p253 = scmp.eq.s32.totalorder %s24, 0
      %p254 = por %p252, %p253
      %p255 = scmp.ne.s32.totalorder %s247, %s249
      %p256 = scmp.eq.s32.totalorder %s29, 1
      %p257 = por %p255, %p256
      %p258 = scmp.ne.s32.totalorder %s249, %s250
      %p259 = scmp.eq.s32.totalorder %s29, 0
      %p260 = por %p258, %p259
      %p261 = scmp.ne.s32.totalorder %s249, %s250
      %p262 = scmp.eq.s32.totalorder %s30, 1
      %p263 = por %p261, %p262
      %p265 = scmp.ne.s32.totalorder %s250, %s264
      %p266 = scmp.eq.s32.totalorder %s30, 0
      %p267 = por %p265, %p266
      %s269 = sadd.s32 %s268, 1
      %p272 = scmp.eq.s32.totalorder %s24, 1
      %p273 = scmp.ne.s32.totalorder %s268, %s270
      %p274 = scmp.eq.s32.totalorder %s24, 0
      %p275 = por %p273, %p274
      %p276 = scmp.ne.s32.totalorder %s268, %s270
      %p277 = scmp.eq.s32.totalorder %s29, 1
      %p278 = por %p276, %p277
      %p279 = scmp.ne.s32.totalorder %s270, %s271
      %p280 = scmp.eq.s32.totalorder %s29, 0
      %p281 = por %p279, %p280
      %p282 = scmp.ne.s32.totalorder %s270, %s271
      %p283 = scmp.eq.s32.totalorder %s30, 1
      %p284 = por %p282, %p283
      %p286 = scmp.ne.s32.totalorder %s271, %s285
      %p287 = scmp.eq.s32.totalorder %s30, 0
      %p288 = por %p286, %p287
      %s290 = sadd.s32 %s289, 1
      %p293 = scmp.eq.s32.totalorder %s24, 1
      %p294 = scmp.ne.s32.totalorder %s289, %s291
      %p295 = scmp.eq.s32.totalorder %s24, 0
      %p296 = por %p294, %p295
      %p297 = scmp.ne.s32.totalorder %s289, %s291
      %p298 = scmp.eq.s32.totalorder %s29, 1
      %p299 = por %p297, %p298
      %p300 = scmp.ne.s32.totalorder %s291, %s292
      %p301 = scmp.eq.s32.totalorder %s29, 0
      %p302 = por %p300, %p301
      %p303 = scmp.ne.s32.totalorder %s291, %s292
      %p304 = scmp.eq.s32.totalorder %s30, 1
      %p305 = por %p303, %p304
      %p307 = scmp.ne.s32.totalorder %s292, %s306
      %p308 = scmp.eq.s32.totalorder %s30, 0
      %p309 = por %p307, %p308
      %s311 = sadd.s32 %s310, 1
      %p314 = scmp.eq.s32.totalorder %s24, 1
      %p315 = scmp.ne.s32.totalorder %s310, %s312
      %p316 = scmp.eq.s32.totalorder %s24, 0
      %p317 = por %p315, %p316
      %p318 = scmp.ne.s32.totalorder %s310, %s312
      %p319 = scmp.eq.s32.totalorder %s29, 1
      %p320 = por %p318, %p319
      %p321 = scmp.ne.s32.totalorder %s312, %s313
      %p322 = scmp.eq.s32.totalorder %s29, 0
      %p323 = por %p321, %p322
      %p324 = scmp.ne.s32.totalorder %s312, %s313
      %p325 = scmp.eq.s32.totalorder %s30, 1
      %p326 = por %p324, %p325
      %p328 = scmp.ne.s32.totalorder %s313, %s327
      %p329 = scmp.eq.s32.totalorder %s30, 0
      %p330 = por %p328, %p329
      %s332 = sadd.s32 %s331, 1
      %p335 = scmp.eq.s32.totalorder %s24, 1
      %p336 = scmp.ne.s32.totalorder %s331, %s333
      %p337 = scmp.eq.s32.totalorder %s24, 0
      %p338 = por %p336, %p337
      %p339 = scmp.ne.s32.totalorder %s331, %s333
      %p340 = scmp.eq.s32.totalorder %s29, 1
      %p341 = por %p339, %p340
      %p342 = scmp.ne.s32.totalorder %s333, %s334
      %p343 = scmp.eq.s32.totalorder %s29, 0
      %p344 = por %p342, %p343
      %p345 = scmp.ne.s32.totalorder %s333, %s334
      %p346 = scmp.eq.s32.totalorder %s30, 1
      %p347 = por %p345, %p346
      %p349 = scmp.ne.s32.totalorder %s334, %s348
      %p350 = scmp.eq.s32.totalorder %s30, 0
      %p351 = por %p349, %p350
      %s352 = ssub.s32 %s24, %s31
      %p353 = scmp.eq.s32.totalorder %s352, 0
      %s355 = sadd.s32 %s354, 1
      %s356 = scalar_select %p353, %s354, %s355
      %p359 = pneg %p353
      %p360 = scmp.eq.s32.totalorder %s24, 1
      %p361 = por %p359, %p360
      %p362 = scmp.ne.s32.totalorder %s354, %s357
      %p363 = scmp.eq.s32.totalorder %s24, 0
      %p364 = por %p362, %p363
      %p365 = scmp.ne.s32.totalorder %s354, %s357
      %p366 = scmp.eq.s32.totalorder %s29, 1
      %p367 = por %p365, %p366
      %p368 = scmp.ne.s32.totalorder %s357, %s358
      %p369 = scmp.eq.s32.totalorder %s29, 0
      %p370 = por %p368, %p369
      %p371 = scmp.ne.s32.totalorder %s357, %s358
      %p372 = scmp.eq.s32.totalorder %s30, 1
      %p373 = por %p371, %p372
      %p375 = scmp.ne.s32.totalorder %s358, %s374
      %p376 = scmp.eq.s32.totalorder %s30, 0
      %p377 = por %p375, %p376
      %p378 = scmp.le.s32.totalorder 1, %s24
      %p379 = scmp.lt.s32.totalorder %s24, 3
      %p380 = pnand %p378, %p379
      %p381 = pneg %p380
      // Predicated region
      $region9: #{lenet5_forward.1} parent=5 // pred_check
        _
      $region10: #{lenet5_forward.1} parent=5 // pred_check_branch
        %383 = sbr.rel (%p380) target = $region12
      $region11: #{lenet5_forward.1} parent=5 // pred_region
        %s384 = ssub.s32 %s24, 1
        // Predicated region
        $region13: #{lenet5_forward.1} parent=11 // pred_check
          %p385 = pneg %p71
        $region14: #{lenet5_forward.1} parent=11 // pred_check_branch
          %387 = sbr.rel (%p385) target = $region16
        $region15: #{lenet5_forward.1} parent=11 // pred_region
          _
        $region16: #{lenet5_forward.1} parent=11 // pred_fallthru
          _
        // Predicated region
        $region17: #{lenet5_forward.1} parent=11 // pred_check
          %p388 = pneg %p92
        $region18: #{lenet5_forward.1} parent=11 // pred_check_branch
          %390 = sbr.rel (%p388) target = $region20
        $region19: #{lenet5_forward.1} parent=11 // pred_region
          _
        $region20: #{lenet5_forward.1} parent=11 // pred_fallthru
          _
        // Predicated region
        $region21: #{lenet5_forward.1} parent=11 // pred_check
          %p391 = pneg %p113
        $region22: #{lenet5_forward.1} parent=11 // pred_check_branch
          %393 = sbr.rel (%p391) target = $region24
        $region23: #{lenet5_forward.1} parent=11 // pred_region
          _
        $region24: #{lenet5_forward.1} parent=11 // pred_fallthru
          _
        // Predicated region
        $region25: #{lenet5_forward.1} parent=11 // pred_check
          %p394 = pneg %p134
        $region26: #{lenet5_forward.1} parent=11 // pred_check_branch
          %396 = sbr.rel (%p394) target = $region28
        $region27: #{lenet5_forward.1} parent=11 // pred_region
          _
        $region28: #{lenet5_forward.1} parent=11 // pred_fallthru
          _
        // Predicated region
        $region29: #{lenet5_forward.1} parent=11 // pred_check
          %p397 = pneg %p155
        $region30: #{lenet5_forward.1} parent=11 // pred_check_branch
          %399 = sbr.rel (%p397) target = $region32
        $region31: #{lenet5_forward.1} parent=11 // pred_region
          _
        $region32: #{lenet5_forward.1} parent=11 // pred_fallthru
          _
        // Predicated region
        $region33: #{lenet5_forward.1} parent=11 // pred_check
          %p400 = pneg %p176
        $region34: #{lenet5_forward.1} parent=11 // pred_check_branch
          %402 = sbr.rel (%p400) target = $region36
        $region35: #{lenet5_forward.1} parent=11 // pred_region
          _
        $region36: #{lenet5_forward.1} parent=11 // pred_fallthru
          _
        // Predicated region
        $region37: #{lenet5_forward.1} parent=11 // pred_check
          %p403 = pneg %p197
        $region38: #{lenet5_forward.1} parent=11 // pred_check_branch
          %405 = sbr.rel (%p403) target = $region40
        $region39: #{lenet5_forward.1} parent=11 // pred_region
          _
        $region40: #{lenet5_forward.1} parent=11 // pred_fallthru
          _
        // Predicated region
        $region41: #{lenet5_forward.1} parent=11 // pred_check
          %p406 = pneg %p218
        $region42: #{lenet5_forward.1} parent=11 // pred_check_branch
          %408 = sbr.rel (%p406) target = $region44
        $region43: #{lenet5_forward.1} parent=11 // pred_region
          _
        $region44: #{lenet5_forward.1} parent=11 // pred_fallthru
          _
        // Predicated region
        $region45: #{lenet5_forward.1} parent=11 // pred_check
          %p409 = pneg %p239
        $region46: #{lenet5_forward.1} parent=11 // pred_check_branch
          %411 = sbr.rel (%p409) target = $region48
        $region47: #{lenet5_forward.1} parent=11 // pred_region
          _
        $region48: #{lenet5_forward.1} parent=11 // pred_fallthru
          _
        // Predicated region
        $region49: #{lenet5_forward.1} parent=11 // pred_check
          %p412 = pneg %p260
        $region50: #{lenet5_forward.1} parent=11 // pred_check_branch
          %414 = sbr.rel (%p412) target = $region52
        $region51: #{lenet5_forward.1} parent=11 // pred_region
          _
        $region52: #{lenet5_forward.1} parent=11 // pred_fallthru
          _
        // Predicated region
        $region53: #{lenet5_forward.1} parent=11 // pred_check
          %p415 = pneg %p281
        $region54: #{lenet5_forward.1} parent=11 // pred_check_branch
          %417 = sbr.rel (%p415) target = $region56
        $region55: #{lenet5_forward.1} parent=11 // pred_region
          _
        $region56: #{lenet5_forward.1} parent=11 // pred_fallthru
          _
        // Predicated region
        $region57: #{lenet5_forward.1} parent=11 // pred_check
          %p418 = pneg %p302
        $region58: #{lenet5_forward.1} parent=11 // pred_check_branch
          %420 = sbr.rel (%p418) target = $region60
        $region59: #{lenet5_forward.1} parent=11 // pred_region
          _
        $region60: #{lenet5_forward.1} parent=11 // pred_fallthru
          _
        // Predicated region
        $region61: #{lenet5_forward.1} parent=11 // pred_check
          %p421 = pneg %p323
        $region62: #{lenet5_forward.1} parent=11 // pred_check_branch
          %423 = sbr.rel (%p421) target = $region64
        $region63: #{lenet5_forward.1} parent=11 // pred_region
          _
        $region64: #{lenet5_forward.1} parent=11 // pred_fallthru
          _
        // Predicated region
        $region65: #{lenet5_forward.1} parent=11 // pred_check
          %p424 = pneg %p344
        $region66: #{lenet5_forward.1} parent=11 // pred_check_branch
          %426 = sbr.rel (%p424) target = $region68
        $region67: #{lenet5_forward.1} parent=11 // pred_region
          _
        $region68: #{lenet5_forward.1} parent=11 // pred_fallthru
          _
      $region12: #{lenet5_forward.1} parent=5 // pred_fallthru
        _
      %p427 = scmp.lt.s32.totalorder %s24, 2
      // Predicated region
      $region69: #{lenet5_forward.1} parent=5 // pred_check
        %p428 = pneg %p427
      $region70: #{lenet5_forward.1} parent=5 // pred_check_branch
        %430 = sbr.rel (%p428) target = $region72
      $region71: #{lenet5_forward.1} parent=5 // pred_region
        // Predicated region
        $region73: #{lenet5_forward.1} parent=71 // pred_check
          %p431 = pneg %p44
        $region74: #{lenet5_forward.1} parent=71 // pred_check_branch
          %433 = sbr.rel (%p431) target = $region76
        $region75: #{lenet5_forward.1} parent=71 // pred_region
          %p434 = scmp.lt.s32.totalorder %s24, 1
          %s435 = scalar_select %p434, %s24, 1
          %s436 = smul.addr %s435, 4
          %s437 = smul.addr %s436, 8
          %s438 = scalar_lea.vmem %s0, %s437
        $region76: #{lenet5_forward.1} parent=71 // pred_fallthru
          _
      $region72: #{lenet5_forward.1} parent=5 // pred_fallthru
        _
      %p439 = scmp.le.s32.totalorder 1, %s24
      %p440 = scmp.lt.s32.totalorder %s24, 3
      %p441 = pnand %p439, %p440
      %p442 = pneg %p441
      // Predicated region
      $region77: #{lenet5_forward.1} parent=5 // pred_check
        _
      $region78: #{lenet5_forward.1} parent=5 // pred_check_branch
        %444 = sbr.rel (%p441) target = $region80
      $region79: #{lenet5_forward.1} parent=5 // pred_region
        %s445 = ssub.s32 %s24, 1
        %p446 = scmp.lt.s32.totalorder %s29, 1
        %s447 = scalar_select %p446, %s29, 1
        %s448 = smul.addr %s447, 4
        %s449 = smul.addr %s448, 8
        %s450 = scalar_lea.vmem %s0, %s449
        %p451 = pneg %p50
        %p452 = pneg %p47
        %p453 = pneg %p71
        %p454 = pneg %p68
        %p455 = pneg %p92
        %p456 = pneg %p89
        %p457 = pneg %p113
        %p458 = pneg %p110
        %p459 = pneg %p134
        %p460 = pneg %p131
        %p461 = pneg %p155
        %p462 = pneg %p152
        %p463 = pneg %p176
        %p464 = pneg %p173
        %p465 = pneg %p197
        %p466 = pneg %p194
        %p467 = pneg %p218
        %p468 = pneg %p215
        %p469 = pneg %p239
        %p470 = pneg %p236
        %p471 = pneg %p260
        %p472 = pneg %p257
        %p473 = pneg %p281
        %p474 = pneg %p278
        %p475 = pneg %p302
        %p476 = pneg %p299
        %p477 = pneg %p323
        %p478 = pneg %p320
        %p479 = pneg %p344
        %p480 = pneg %p341
        %p481 = pneg %p370
        %p482 = pneg %p367
        %s483 = sand.u32 %s357, 1
        %s484 = scalar_lea.sflag [#allocation3], %s483
        %s485 = sand.u32 %s357, 1
        %s486 = scalar_lea.vmem [#allocation2], %s485
        %p487 = scmp.lt.s32.totalorder %s29, 1
        %s488 = scalar_select %p487, %s29, 1
        %s489 = smul.addr %s488, 4
        %s490 = smul.addr %s489, 8
        %s491 = scalar_lea.vmem %s0, %s490
        %v493 = vld [vmem:[%s491] sm:$0xff]
        %v494 = vld [vmem:[%s491 + $0x8] sm:$0xff]
        %v495 = vld [vmem:[%s491 + $0x10] sm:$0xff]
        %v496 = vld [vmem:[%s491 + $0x18] sm:$0xff]
        %v497 = vpack.c.bf16 %v494, %v493
        %v498 = vpack.c.bf16 %v496, %v495
        %v499 = vld [vmem:[%s1] sm:$0xff]
        %v500 = vld [vmem:[%s1 + $0x8] sm:$0xff]
        %v501 = vld [vmem:[%s1 + $0x10] sm:$0xff]
        %v502 = vld [vmem:[%s1 + $0x18] sm:$0xff]
        %s503 = scalar_lea.vmem %s1, 32
        %v504 = vld [vmem:[%s503] sm:$0xff]
        %v505 = vld [vmem:[%s503 + $0x8] sm:$0xff]
        %v506 = vld [vmem:[%s503 + $0x10] sm:$0xff]
        %v507 = vld [vmem:[%s503 + $0x18] sm:$0xff]
        %vm508 = vsmask.f32 7424
        %v510 = vshrl.u32 %v497, 16
        %v512 = vshll.u32 %v497, 16
        %v514 = vrot.slane %v512, 1
        %v515 = vor.u32 %v510, %v514
        %v517 = vshll.u32 %v498, 16
        %v519 = vrot.slane %v517, 1
        %v520 = vsel %vm508, %v515, %v519
        %v521 = vshrl.u32 %v498, 16
        %v523 = vor.u32 %v521, %v519
        %v528 = vunpack.c.l.b16 %v504
        %v529 = vunpack.c.h.b16 %v504
        %v530 = vunpack.c.l.b16 %v505
        %v531 = vunpack.c.h.b16 %v505
        %v532 = vunpack.c.l.b16 %v506
        %v533 = vunpack.c.h.b16 %v506
        %v534 = vunpack.c.l.b16 %v507
        %v535 = vunpack.c.h.b16 %v507
        %v536 = vpack.c.b16 %v530, %v528
        %v537 = vpack.c.b16 %v531, %v529
        %v538 = vpack.c.b16 %v534, %v532
        %v539 = vpack.c.b16 %v535, %v533
        %vm544 = vcmask 261120
        %v546 = vsel %vm544, %v520, 0
        %v549 = vsel %vm544, %v523, 0
        %551 = vmatprep.subr.bf16.mxu0 %v537
        %552 = vmatpush1.bf16.msra.mxu0 %v536
        %553 = vmatprep.subr.bf16.mxu0 %v539
        %554 = vmatpush1.bf16.msra.mxu0 %v538
        %555 = vmatprep.subr.bf16.mxu0 0
        %556 = vmatpush1.bf16.msra.mxu0 0
        %557 = vmatprep.subr.bf16.mxu0 0
        %558 = vmatpush1.bf16.msra.mxu0 0
        %559 = vmatprep.subr.bf16.mxu0 0
        %560 = vmatpush1.bf16.msra.mxu0 0
        %561 = vmatprep.subr.bf16.mxu0 0
        %562 = vmatpush1.bf16.msra.mxu0 0
        %563 = vmatprep.subr.bf16.mxu0 0
        %564 = vmatpush1.bf16.msra.mxu0 0
        %565 = vmatprep.subr.bf16.mxu0 0
        %566 = vmatpush1.bf16.msra.mxu0 0
        %567 = vmatprep.subr.bf16.mxu0 0
        %568 = vmatpush1.bf16.msra.mxu0 0
        %569 = vmatprep.subr.bf16.mxu0 0
        %570 = vmatpush1.bf16.msra.mxu0 0
        %571 = vmatprep.subr.bf16.mxu0 0
        %572 = vmatpush1.bf16.msra.mxu0 0
        %573 = vmatprep.subr.bf16.mxu0 0
        %574 = vmatpush1.bf16.msra.mxu0 0
        %575 = vmatprep.subr.bf16.mxu0 0
        %576 = vmatpush1.bf16.msra.mxu0 0
        %577 = vmatprep.subr.bf16.mxu0 0
        %578 = vmatpush1.bf16.msra.mxu0 0
        %579 = vmatprep.subr.bf16.mxu0 0
        %580 = vmatpush1.bf16.msra.mxu0 0
        %581 = vmatprep.subr.bf16.mxu0 0
        %582 = vmatpush1.bf16.msra.mxu0 0
        %583 = vmatprep.mubr.bf16.mxu0 0
        %584 = vmatmul.mubr.bf16.gmra.mrb[0].mxu0 %v546
        %v585 = vpop.f32.mrb[0].mxu0
        %v586 = vadd.f32 0.0, %v585
        %v587 = vpop.f32.mrb[0].mxu0
        %v588 = vadd.f32 0.0, %v587
        %v589 = vpop.f32.mrb[0].mxu0
        %v590 = vadd.f32 0.0, %v589
        %v591 = vpop.f32.mrb[0].mxu0
        %v592 = vadd.f32 0.0, %v591
        %593 = vmatprep.mubr.bf16.mxu0 0
        %594 = vmatmul.mubr.bf16.gmra.mrb[0].mxu0 %v549
        %v595 = vpop.f32.mrb[0].mxu0
        %v596 = vadd.f32 0.0, %v595
        %v597 = vpop.f32.mrb[0].mxu0
        %v598 = vadd.f32 0.0, %v597
        %v599 = vpop.f32.mrb[0].mxu0
        %v600 = vadd.f32 0.0, %v599
        %v601 = vpop.f32.mrb[0].mxu0
        %v602 = vadd.f32 0.0, %v601
        %603 = vdwg.mxu0
        %v608 = vunpack.c.l.b16 %v499
        %v609 = vunpack.c.h.b16 %v499
        %v610 = vunpack.c.l.b16 %v500
        %v611 = vunpack.c.h.b16 %v500
        %v612 = vunpack.c.l.b16 %v501
        %v613 = vunpack.c.h.b16 %v501
        %v614 = vunpack.c.l.b16 %v502
        %v615 = vunpack.c.h.b16 %v502
        %v616 = vpack.c.b16 %v610, %v608
        %v617 = vpack.c.b16 %v611, %v609
        %v618 = vpack.c.b16 %v614, %v612
        %v619 = vpack.c.b16 %v615, %v613
        %v624 = vsel %vm544, %v497, 0
        %v626 = vsel %vm544, %v498, 0
        %628 = vmatprep.subr.bf16.mxu0 %v617
        %629 = vmatpush1.bf16.msra.mxu0 %v616
        %630 = vmatprep.subr.bf16.mxu0 %v619
        %631 = vmatpush1.bf16.msra.mxu0 %v618
        %632 = vmatprep.subr.bf16.mxu0 0
        %633 = vmatpush1.bf16.msra.mxu0 0
        %634 = vmatprep.subr.bf16.mxu0 0
        %635 = vmatpush1.bf16.msra.mxu0 0
        %636 = vmatprep.subr.bf16.mxu0 0
        %637 = vmatpush1.bf16.msra.mxu0 0
        %638 = vmatprep.subr.bf16.mxu0 0
        %639 = vmatpush1.bf16.msra.mxu0 0
        %640 = vmatprep.subr.bf16.mxu0 0
        %641 = vmatpush1.bf16.msra.mxu0 0
        %642 = vmatprep.subr.bf16.mxu0 0
        %643 = vmatpush1.bf16.msra.mxu0 0
        %644 = vmatprep.subr.bf16.mxu0 0
        %645 = vmatpush1.bf16.msra.mxu0 0
        %646 = vmatprep.subr.bf16.mxu0 0
        %647 = vmatpush1.bf16.msra.mxu0 0
        %648 = vmatprep.subr.bf16.mxu0 0
        %649 = vmatpush1.bf16.msra.mxu0 0
        %650 = vmatprep.subr.bf16.mxu0 0
        %651 = vmatpush1.bf16.msra.mxu0 0
        %652 = vmatprep.subr.bf16.mxu0 0
        %653 = vmatpush1.bf16.msra.mxu0 0
        %654 = vmatprep.subr.bf16.mxu0 0
        %655 = vmatpush1.bf16.msra.mxu0 0
        %656 = vmatprep.subr.bf16.mxu0 0
        %657 = vmatpush1.bf16.msra.mxu0 0
        %658 = vmatprep.subr.bf16.mxu0 0
        %659 = vmatpush1.bf16.msra.mxu0 0
        %660 = vmatprep.mubr.bf16.mxu0 0
        %661 = vmatmul.mubr.bf16.gmra.mrb[0].mxu0 %v624
        %v662 = vpop.f32.mrb[0].mxu0
        %v663 = vadd.f32 %v586, %v662
        %v664 = vpop.f32.mrb[0].mxu0
        %v665 = vadd.f32 %v588, %v664
        %v666 = vpop.f32.mrb[0].mxu0
        %v667 = vadd.f32 %v590, %v666
        %v668 = vpop.f32.mrb[0].mxu0
        %v669 = vadd.f32 %v592, %v668
        %670 = vmatprep.mubr.bf16.mxu0 0
        %671 = vmatmul.mubr.bf16.gmra.mrb[0].mxu0 %v626
        %v672 = vpop.f32.mrb[0].mxu0
        %v673 = vadd.f32 %v596, %v672
        %v674 = vpop.f32.mrb[0].mxu0
        %v675 = vadd.f32 %v598, %v674
        %v676 = vpop.f32.mrb[0].mxu0
        %v677 = vadd.f32 %v600, %v676
        %v678 = vpop.f32.mrb[0].mxu0
        %v679 = vadd.f32 %v602, %v678
        %680 = vdwg.mxu0
        %s681 = scalar_lea.vmem %s1, 64
        %v682 = vld [vmem:[%s681] sm:$0xff]
        %v683 = vld [vmem:[%s681 + $0x8] sm:$0xff]
        %v684 = vld [vmem:[%s681 + $0x10] sm:$0xff]
        %v685 = vld [vmem:[%s681 + $0x18] sm:$0xff]
        %vm688 = vcmask 1046528
        %v689 = vrot.slane %v497, 1
        %v690 = vrot.slane %v498, 1
        %v691 = vsel %vm688, %v689, %v690
        %v696 = vunpack.c.l.b16 %v682
        %v697 = vunpack.c.h.b16 %v682
        %v698 = vunpack.c.l.b16 %v683
        %v699 = vunpack.c.h.b16 %v683
        %v700 = vunpack.c.l.b16 %v684
        %v701 = vunpack.c.h.b16 %v684
        %v702 = vunpack.c.l.b16 %v685
        %v703 = vunpack.c.h.b16 %v685
        %v704 = vpack.c.b16 %v698, %v696
        %v705 = vpack.c.b16 %v699, %v697
        %v706 = vpack.c.b16 %v702, %v700
        %v707 = vpack.c.b16 %v703, %v701
        %v713 = vsel %vm544, %v691, 0
        %v716 = vsel %vm544, %v690, 0
        %718 = vmatprep.subr.bf16.mxu0 %v705
        %719 = vmatpush1.bf16.msra.mxu0 %v704
        %720 = vmatprep.subr.bf16.mxu0 %v707
        %721 = vmatpush1.bf16.msra.mxu0 %v706
        %722 = vmatprep.subr.bf16.mxu0 0
        %723 = vmatpush1.bf16.msra.mxu0 0
        %724 = vmatprep.subr.bf16.mxu0 0
        %725 = vmatpush1.bf16.msra.mxu0 0
        %726 = vmatprep.subr.bf16.mxu0 0
        %727 = vmatpush1.bf16.msra.mxu0 0
        %728 = vmatprep.subr.bf16.mxu0 0
        %729 = vmatpush1.bf16.msra.mxu0 0
        %730 = vmatprep.subr.bf16.mxu0 0
        %731 = vmatpush1.bf16.msra.mxu0 0
        %732 = vmatprep.subr.bf16.mxu0 0
        %733 = vmatpush1.bf16.msra.mxu0 0
        %734 = vmatprep.subr.bf16.mxu0 0
        %735 = vmatpush1.bf16.msra.mxu0 0
        %736 = vmatprep.subr.bf16.mxu0 0
        %737 = vmatpush1.bf16.msra.mxu0 0
        %738 = vmatprep.subr.bf16.mxu0 0
        %739 = vmatpush1.bf16.msra.mxu0 0
        %740 = vmatprep.subr.bf16.mxu0 0
        %741 = vmatpush1.bf16.msra.mxu0 0
        %742 = vmatprep.subr.bf16.mxu0 0
        %743 = vmatpush1.bf16.msra.mxu0 0
        %744 = vmatprep.subr.bf16.mxu0 0
        %745 = vmatpush1.bf16.msra.mxu0 0
        %746 = vmatprep.subr.bf16.mxu0 0
        %747 = vmatpush1.bf16.msra.mxu0 0
        %748 = vmatprep.subr.bf16.mxu0 0
        %749 = vmatpush1.bf16.msra.mxu0 0
        %750 = vmatprep.mubr.bf16.mxu0 0
        %751 = vmatmul.mubr.bf16.gmra.mrb[0].mxu0 %v713
        %v752 = vpop.f32.mrb[0].mxu0
        %v753 = vadd.f32 0.0, %v752
        %v754 = vpop.f32.mrb[0].mxu0
        %v755 = vadd.f32 0.0, %v754
        %v756 = vpop.f32.mrb[0].mxu0
        %v757 = vadd.f32 0.0, %v756
        %v758 = vpop.f32.mrb[0].mxu0
        %v759 = vadd.f32 0.0, %v758
        %760 = vmatprep.mubr.bf16.mxu0 0
        %761 = vmatmul.mubr.bf16.gmra.mrb[0].mxu0 %v716
        %v762 = vpop.f32.mrb[0].mxu0
        %v763 = vadd.f32 0.0, %v762
        %v764 = vpop.f32.mrb[0].mxu0
        %v765 = vadd.f32 0.0, %v764
        %v766 = vpop.f32.mrb[0].mxu0
        %v767 = vadd.f32 0.0, %v766
        %v768 = vpop.f32.mrb[0].mxu0
        %v769 = vadd.f32 0.0, %v768
        %770 = vdwg.mxu0
        %v771 = vadd.f32 %v663, %v753
        %v772 = vadd.f32 %v665, %v755
        %v773 = vadd.f32 %v667, %v757
        %v774 = vadd.f32 %v669, %v759
        %v775 = vadd.f32 %v673, %v763
        %v776 = vadd.f32 %v675, %v765
        %v777 = vadd.f32 %v677, %v767
        %v778 = vadd.f32 %v679, %v769
        %s779 = scalar_lea.vmem %s1, 96
        %v780 = vld [vmem:[%s779] sm:$0xff]
        %v781 = vld [vmem:[%s779 + $0x8] sm:$0xff]
        %v782 = vld [vmem:[%s779 + $0x10] sm:$0xff]
        %v783 = vld [vmem:[%s779 + $0x18] sm:$0xff]
        %vm784 = vsmask.f32 6400
        %v785 = vrot.slane %v510, 1
        %v786 = vrot.slane %v512, 2
        %v787 = vor.u32 %v785, %v786
        %v788 = vrot.slane %v521, 1
        %v789 = vrot.slane %v517, 2
        %v790 = vor.u32 %v788, %v789
        %v791 = vsel %vm784, %v787, %v790
        %v796 = vunpack.c.l.b16 %v780
        %v797 = vunpack.c.h.b16 %v780
        %v798 = vunpack.c.l.b16 %v781
        %v799 = vunpack.c.h.b16 %v781
        %v800 = vunpack.c.l.b16 %v782
        %v801 = vunpack.c.h.b16 %v782
        %v802 = vunpack.c.l.b16 %v783
        %v803 = vunpack.c.h.b16 %v783
        %v804 = vpack.c.b16 %v798, %v796
        %v805 = vpack.c.b16 %v799, %v797
        %v806 = vpack.c.b16 %v802, %v800
        %v807 = vpack.c.b16 %v803, %v801
        %v813 = vsel %vm544, %v791, 0
        %v816 = vsel %vm544, %v790, 0
        %818 = vmatprep.subr.bf16.mxu0 %v805
        %819 = vmatpush1.bf16.msra.mxu0 %v804
        %820 = vmatprep.subr.bf16.mxu0 %v807
        %821 = vmatpush1.bf16.msra.mxu0 %v806
        %822 = vmatprep.subr.bf16.mxu0 0
        %823 = vmatpush1.bf16.msra.mxu0 0
        %824 = vmatprep.subr.bf16.mxu0 0
        %825 = vmatpush1.bf16.msra.mxu0 0
        %826 = vmatprep.subr.bf16.mxu0 0
        %827 = vmatpush1.bf16.msra.mxu0 0
        %828 = vmatprep.subr.bf16.mxu0 0
        %829 = vmatpush1.bf16.msra.mxu0 0
        %830 = vmatprep.subr.bf16.mxu0 0
        %831 = vmatpush1.bf16.msra.mxu0 0
        %832 = vmatprep.subr.bf16.mxu0 0
        %833 = vmatpush1.bf16.msra.mxu0 0
        %834 = vmatprep.subr.bf16.mxu0 0
        %835 = vmatpush1.bf16.msra.mxu0 0
        %836 = vmatprep.subr.bf16.mxu0 0
        %837 = vmatpush1.bf16.msra.mxu0 0
        %838 = vmatprep.subr.bf16.mxu0 0
        %839 = vmatpush1.bf16.msra.mxu0 0
        %840 = vmatprep.subr.bf16.mxu0 0
        %841 = vmatpush1.bf16.msra.mxu0 0
        %842 = vmatprep.subr.bf16.mxu0 0
        %843 = vmatpush1.bf16.msra.mxu0 0
        %844 = vmatprep.subr.bf16.mxu0 0
        %845 = vmatpush1.bf16.msra.mxu0 0
        %846 = vmatprep.subr.bf16.mxu0 0
        %847 = vmatpush1.bf16.msra.mxu0 0
        %848 = vmatprep.subr.bf16.mxu0 0
        %849 = vmatpush1.bf16.msra.mxu0 0
        %850 = vmatprep.mubr.bf16.mxu0 0
        %851 = vmatmul.mubr.bf16.gmra.mrb[0].mxu0 %v813
        %v852 = vpop.f32.mrb[0].mxu0
        %v853 = vadd.f32 0.0, %v852
        %v854 = vpop.f32.mrb[0].mxu0
        %v855 = vadd.f32 0.0, %v854
        %v856 = vpop.f32.mrb[0].mxu0
        %v857 = vadd.f32 0.0, %v856
        %v858 = vpop.f32.mrb[0].mxu0
        %v859 = vadd.f32 0.0, %v858
        %860 = vmatprep.mubr.bf16.mxu0 0
        %861 = vmatmul.mubr.bf16.gmra.mrb[0].mxu0 %v816
        %v862 = vpop.f32.mrb[0].mxu0
        %v863 = vadd.f32 0.0, %v862
        %v864 = vpop.f32.mrb[0].mxu0
        %v865 = vadd.f32 0.0, %v864
        %v866 = vpop.f32.mrb[0].mxu0
        %v867 = vadd.f32 0.0, %v866
        %v868 = vpop.f32.mrb[0].mxu0
        %v869 = vadd.f32 0.0, %v868
        %870 = vdwg.mxu0
        %v871 = vadd.f32 %v771, %v853
        %v872 = vadd.f32 %v772, %v855
        %v873 = vadd.f32 %v773, %v857
        %v874 = vadd.f32 %v774, %v859
        %v875 = vadd.f32 %v775, %v863
        %v876 = vadd.f32 %v776, %v865
        %v877 = vadd.f32 %v777, %v867
        %v878 = vadd.f32 %v778, %v869
        %s879 = scalar_lea.vmem %s1, 128
        %v880 = vld [vmem:[%s879] sm:$0xff]
        %v881 = vld [vmem:[%s879 + $0x8] sm:$0xff]
        %v882 = vld [vmem:[%s879 + $0x10] sm:$0xff]
        %v883 = vld [vmem:[%s879 + $0x18] sm:$0xff]
        %vm884 = vcmask 1045504
        %v885 = vrot.slane %v497, 2
        %v886 = vrot.slane %v498, 2
        %v887 = vsel %vm884, %v885, %v886
        %v892 = vunpack.c.l.b16 %v880
        %v893 = vunpack.c.h.b16 %v880
        %v894 = vunpack.c.l.b16 %v881
        %v895 = vunpack.c.h.b16 %v881
        %v896 = vunpack.c.l.b16 %v882
        %v897 = vunpack.c.h.b16 %v882
        %v898 = vunpack.c.l.b16 %v883
        %v899 = vunpack.c.h.b16 %v883
        %v900 = vpack.c.b16 %v894, %v892
        %v901 = vpack.c.b16 %v895, %v893
        %v902 = vpack.c.b16 %v898, %v896
        %v903 = vpack.c.b16 %v899, %v897
        %v909 = vsel %vm544, %v887, 0
        %v912 = vsel %vm544, %v886, 0
        %914 = vmatprep.subr.bf16.mxu0 %v901
        %915 = vmatpush1.bf16.msra.mxu0 %v900
        %916 = vmatprep.subr.bf16.mxu0 %v903
        %917 = vmatpush1.bf16.msra.mxu0 %v902
        %918 = vmatprep.subr.bf16.mxu0 0
        %919 = vmatpush1.bf16.msra.mxu0 0
        %920 = vmatprep.subr.bf16.mxu0 0
        %921 = vmatpush1.bf16.msra.mxu0 0
        %922 = vmatprep.subr.bf16.mxu0 0
        %923 = vmatpush1.bf16.msra.mxu0 0
        %924 = vmatprep.subr.bf16.mxu0 0
        %925 = vmatpush1.bf16.msra.mxu0 0
        %926 = vmatprep.subr.bf16.mxu0 0
        %927 = vmatpush1.bf16.msra.mxu0 0
        %928 = vmatprep.subr.bf16.mxu0 0
        %929 = vmatpush1.bf16.msra.mxu0 0
        %930 = vmatprep.subr.bf16.mxu0 0
        %931 = vmatpush1.bf16.msra.mxu0 0
        %932 = vmatprep.subr.bf16.mxu0 0
        %933 = vmatpush1.bf16.msra.mxu0 0
        %934 = vmatprep.subr.bf16.mxu0 0
        %935 = vmatpush1.bf16.msra.mxu0 0
        %936 = vmatprep.subr.bf16.mxu0 0
        %937 = vmatpush1.bf16.msra.mxu0 0
        %938 = vmatprep.subr.bf16.mxu0 0
        %939 = vmatpush1.bf16.msra.mxu0 0
        %940 = vmatprep.subr.bf16.mxu0 0
        %941 = vmatpush1.bf16.msra.mxu0 0
        %942 = vmatprep.subr.bf16.mxu0 0
        %943 = vmatpush1.bf16.msra.mxu0 0
        %944 = vmatprep.subr.bf16.mxu0 0
        %945 = vmatpush1.bf16.msra.mxu0 0
        %946 = vmatprep.mubr.bf16.mxu0 0
        %947 = vmatmul.mubr.bf16.gmra.mrb[0].mxu0 %v909
        %v948 = vpop.f32.mrb[0].mxu0
        %v949 = vadd.f32 0.0, %v948
        %v950 = vpop.f32.mrb[0].mxu0
        %v951 = vadd.f32 0.0, %v950
        %v952 = vpop.f32.mrb[0].mxu0
        %v953 = vadd.f32 0.0, %v952
        %v954 = vpop.f32.mrb[0].mxu0
        %v955 = vadd.f32 0.0, %v954
        %956 = vmatprep.mubr.bf16.mxu0 0
        %957 = vmatmul.mubr.bf16.gmra.mrb[0].mxu0 %v912
        %v958 = vpop.f32.mrb[0].mxu0
        %v959 = vadd.f32 0.0, %v958
        %v960 = vpop.f32.mrb[0].mxu0
        %v961 = vadd.f32 0.0, %v960
        %v962 = vpop.f32.mrb[0].mxu0
        %v963 = vadd.f32 0.0, %v962
        %v964 = vpop.f32.mrb[0].mxu0
        %v965 = vadd.f32 0.0, %v964
        %966 = vdwg.mxu0
        %v967 = vadd.f32 %v871, %v949
        %v968 = vadd.f32 %v872, %v951
        %v969 = vadd.f32 %v873, %v953
        %v970 = vadd.f32 %v874, %v955
        %v971 = vadd.f32 %v875, %v959
        %v972 = vadd.f32 %v876, %v961
        %v973 = vadd.f32 %v877, %v963
        %v974 = vadd.f32 %v878, %v965
        %v975 = vld [vmem:[%s2] sm:$0x3]
        %v977 = vlaneseq
        %v978 = vshrl.u32 %v977, 7
        %v979 = vsub.s32 0, %v978
        %v980 = vrot.slane %v975, %v979
        %v981 = vlaneseq
        %v982 = vshrl.u32 %v981, 7
        %v983 = vsub.s32 1, %v982
        %v984 = vrot.slane %v975, %v983
        %v987 = vadd.f32 %v967, %v980
        %v988 = vadd.f32 %v968, %v984
        %v989 = vadd.f32 %v969, %v980
        %v990 = vadd.f32 %v970, %v984
        %v991 = vadd.f32 %v971, %v980
        %v992 = vadd.f32 %v972, %v984
        %v993 = vadd.f32 %v973, %v980
        %v994 = vadd.f32 %v974, %v984
        %v995 = vmax.f32 %v987, 0.0
        %v996 = vmax.f32 %v988, 0.0
        %v997 = vmax.f32 %v989, 0.0
        %v998 = vmax.f32 %v990, 0.0
        %v999 = vmax.f32 %v991, 0.0
        %v1000 = vmax.f32 %v992, 0.0
        %v1001 = vmax.f32 %v993, 0.0
        %v1002 = vmax.f32 %v994, 0.0
        %vm1011 = vcmask 1046528
        %v1012 = vrot.slane %v995, 1
        %v1013 = vrot.slane %v997, 1
        %v1014 = vsel %vm1011, %v1012, %v1013
        %v1015 = vrot.slane %v996, 1
        %v1016 = vrot.slane %v998, 1
        %v1017 = vsel %vm1011, %v1015, %v1016
        %v1018 = vrot.slane %v999, 1
        %v1019 = vsel %vm1011, %v1013, %v1018
        %v1020 = vrot.slane %v1000, 1
        %v1021 = vsel %vm1011, %v1016, %v1020
        %v1022 = vrot.slane %v1001, 1
        %v1023 = vsel %vm1011, %v1018, %v1022
        %v1024 = vrot.slane %v1002, 1
        %v1025 = vsel %vm1011, %v1020, %v1024
        %v1034 = vmax.f32 %v995, %v1014
        %v1035 = vmax.f32 %v996, %v1017
        %v1036 = vmax.f32 %v997, %v1019
        %v1037 = vmax.f32 %v998, %v1021
        %v1038 = vmax.f32 %v999, %v1023
        %v1039 = vmax.f32 %v1000, %v1025
        %v1040 = vmax.f32 %v1001, %v1022
        %v1041 = vmax.f32 %v1002, %v1024
        %1050 = vrot.lane.b32.xlu0 %v1034, 122
        %v1051 = vpop.permute.xlu0 %1050
        %1052 = vrot.lane.b32.xlu0 %v1035, 122
        %v1053 = vpop.permute.xlu0 %1052
        %1054 = vrot.lane.b32.xlu0 %v1036, 122
        %v1055 = vpop.permute.xlu0 %1054
        %1056 = vrot.lane.b32.xlu0 %v1037, 122
        %v1057 = vpop.permute.xlu0 %1056
        %1058 = vrot.lane.b32.xlu0 %v1038, 122
        %v1059 = vpop.permute.xlu0 %1058
        %1060 = vrot.lane.b32.xlu0 %v1039, 122
        %v1061 = vpop.permute.xlu0 %1060
        %1062 = vrot.lane.b32.xlu0 %v1040, 122
        %v1063 = vpop.permute.xlu0 %1062
        %1064 = vrot.lane.b32.xlu0 %v1041, 122
        %v1065 = vpop.permute.xlu0 %1064
        %vm1066 = vcmask 998400
        %v1067 = vsel %vm1066, %v1051, %v1053
        %v1068 = vsel %vm1066, %v1055, %v1057
        %v1069 = vsel %vm1066, %v1059, %v1061
        %v1070 = vsel %vm1066, %v1063, %v1065
        %v1079 = vmax.f32 %v1034, %v1067
        %v1080 = vmax.f32 %v1035, %v1053
        %v1081 = vmax.f32 %v1036, %v1068
        %v1082 = vmax.f32 %v1037, %v1057
        %v1083 = vmax.f32 %v1038, %v1069
        %v1084 = vmax.f32 %v1039, %v1061
        %v1085 = vmax.f32 %v1040, %v1070
        %v1086 = vmax.f32 %v1041, %v1065
        %v1087 = vpack.c.bf16 %v1081, %v1079
        %v1088 = vpack.c.bf16 %v1082, %v1080
        %v1089 = vpack.c.bf16 %v1085, %v1083
        %v1090 = vpack.c.bf16 %v1086, %v1084
        %v1091 = vld [vmem:[%s3] sm:$0xf]
        %v1092 = vld [vmem:[%s3 + $0x4] sm:$0x7]
        %v1095 = vunpack.c.l.b16 %v1091
        %v1096 = vunpack.c.l.b16 %v1092
        %v1097 = vpack.c.b16 %v1096, %v1095
        %vm1098 = vcmask 220160
        %v1100 = vsel %vm1098, %v1097, 0
        %vm1102 = vcmask 1044480
        %vm1103 = vcmask 1045504
        %v1104 = vsel %vm1102, 4294967295, 65535
        %v1105 = vsel %vm1103, %v1104, 0
        %v1107 = vand.u32 %v1089, %v1105
        %v1110 = vand.u32 %v1090, %v1105
        %1112 = vmatprep.subr.bf16.mxu0 %v1088
        %1113 = vmatpush1.bf16.msra.mxu0 %v1087
        %1114 = vmatprep.subr.bf16.mxu0 %v1110
        %1115 = vmatpush1.bf16.msra.mxu0 %v1107
        %1116 = vmatprep.subr.bf16.mxu0 0
        %1117 = vmatpush1.bf16.msra.mxu0 0
        %1118 = vmatprep.subr.bf16.mxu0 0
        %1119 = vmatpush1.bf16.msra.mxu0 0
        %1120 = vmatprep.subr.bf16.mxu0 0
        %1121 = vmatpush1.bf16.msra.mxu0 0
        %1122 = vmatprep.subr.bf16.mxu0 0
        %1123 = vmatpush1.bf16.msra.mxu0 0
        %1124 = vmatprep.subr.bf16.mxu0 0
        %1125 = vmatpush1.bf16.msra.mxu0 0
        %1126 = vmatprep.subr.bf16.mxu0 0
        %1127 = vmatpush1.bf16.msra.mxu0 0
        %1128 = vmatprep.subr.bf16.mxu0 0
        %1129 = vmatpush1.bf16.msra.mxu0 0
        %1130 = vmatprep.subr.bf16.mxu0 0
        %1131 = vmatpush1.bf16.msra.mxu0 0
        %1132 = vmatprep.subr.bf16.mxu0 0
        %1133 = vmatpush1.bf16.msra.mxu0 0
        %1134 = vmatprep.subr.bf16.mxu0 0
        %1135 = vmatpush1.bf16.msra.mxu0 0
        %1136 = vmatprep.subr.bf16.mxu0 0
        %1137 = vmatpush1.bf16.msra.mxu0 0
        %1138 = vmatprep.subr.bf16.mxu0 0
        %1139 = vmatpush1.bf16.msra.mxu0 0
        %1140 = vmatprep.subr.bf16.mxu0 0
        %1141 = vmatpush1.bf16.msra.mxu0 0
        %1142 = vmatprep.subr.bf16.mxu0 0
        %1143 = vmatpush1.bf16.msra.mxu0 0
        %1144 = vmatprep.mubr.bf16.mxu0 0
        %1145 = vmatmul.mubr.bf16.gmra.mrb[0].mxu0 %v1100
        %v1146 = vpop.f32.mrb[0].mxu0
        %v1147 = vadd.f32 0.0, %v1146
        %v1148 = vpop.f32.mrb[0].mxu0
        %v1149 = vadd.f32 0.0, %v1148
        %v1150 = vpop.f32.mrb[0].mxu0
        %v1151 = vadd.f32 0.0, %v1150
        %v1152 = vpop.f32.mrb[0].mxu0
        %v1153 = vadd.f32 0.0, %v1152
        %1154 = vdwg.mxu0
        %v1155 = vpack.c.bf16 %v1151, %v1147
        %v1156 = vpack.c.bf16 %v1153, %v1149
        %v1157 = vld [vmem:[%s4] sm:$0xf]
        %v1158 = vld [vmem:[%s4 + $0x4] sm:$0xf]
        %v1159 = vld [vmem:[%s4 + $0x8] sm:$0xf]
        %v1160 = vld [vmem:[%s4 + $0xc] sm:$0xf]
        %v1161 = vld [vmem:[%s4 + $0x10] sm:$0xf]
        %v1162 = vld [vmem:[%s4 + $0x14] sm:$0xf]
        %v1163 = vld [vmem:[%s4 + $0x18] sm:$0xf]
        %v1164 = vld [vmem:[%s4 + $0x1c] sm:$0xf]
        %v1165 = vld [vmem:[%s4 + $0x20] sm:$0xf]
        %v1166 = vld [vmem:[%s4 + $0x24] sm:$0xf]
        %v1167 = vld [vmem:[%s4 + $0x28] sm:$0xf]
        %v1168 = vld [vmem:[%s4 + $0x2c] sm:$0xf]
        %v1169 = vld [vmem:[%s4 + $0x30] sm:$0xf]
        %v1170 = vld [vmem:[%s4 + $0x34] sm:$0xf]
        %v1171 = vld [vmem:[%s4 + $0x38] sm:$0xf]
        %v1172 = vld [vmem:[%s4 + $0x3c] sm:$0xf]
        %v1173 = vld [vmem:[%s4 + $0x40] sm:$0xf]
        %v1174 = vld [vmem:[%s4 + $0x44] sm:$0xf]
        %v1175 = vld [vmem:[%s4 + $0x48] sm:$0xf]
        %v1176 = vld [vmem:[%s4 + $0x4c] sm:$0xf]
        %v1177 = vld [vmem:[%s4 + $0x50] sm:$0x1]
        %v1199 = vunpack.c.l.b16 %v1157
        %v1200 = vunpack.c.l.b16 %v1158
        %v1201 = vunpack.c.l.b16 %v1159
        %v1202 = vunpack.c.l.b16 %v1160
        %v1203 = vunpack.c.l.b16 %v1161
        %v1204 = vunpack.c.l.b16 %v1162
        %v1205 = vunpack.c.l.b16 %v1163
        %v1206 = vunpack.c.l.b16 %v1164
        %v1207 = vunpack.c.l.b16 %v1165
        %v1208 = vunpack.c.l.b16 %v1166
        %v1209 = vunpack.c.l.b16 %v1167
        %v1210 = vunpack.c.l.b16 %v1168
        %v1211 = vunpack.c.l.b16 %v1169
        %v1212 = vunpack.c.l.b16 %v1170
        %v1213 = vunpack.c.l.b16 %v1171
        %v1214 = vunpack.c.l.b16 %v1172
        %v1215 = vunpack.c.l.b16 %v1173
        %v1216 = vunpack.c.l.b16 %v1174
        %v1217 = vunpack.c.l.b16 %v1175
        %v1218 = vunpack.c.l.b16 %v1176
        %v1219 = vunpack.c.l.b16 %v1177
        %v1220 = vpack.c.b16 %v1200, %v1199
        %v1221 = vpack.c.b16 %v1202, %v1201
        %v1222 = vpack.c.b16 %v1204, %v1203
        %v1223 = vpack.c.b16 %v1206, %v1205
        %v1224 = vpack.c.b16 %v1208, %v1207
        %v1225 = vpack.c.b16 %v1210, %v1209
        %v1226 = vpack.c.b16 %v1212, %v1211
        %v1227 = vpack.c.b16 %v1214, %v1213
        %v1228 = vpack.c.b16 %v1216, %v1215
        %v1229 = vpack.c.b16 %v1218, %v1217
        %v1230 = vpack.c.b16 %v1219, %v1219
        %vm1241 = vcmask 277504
        %v1243 = vsel %vm1241, %v1156, 0
        %vm1245 = vcmask 1040384
        %v1247 = vsel %vm1245, %v1230, 0
        %1249 = vmatprep.subr.bf16.mxu0 0
        %1250 = vmatpush1.bf16.msra.mxu0 %v1220
        %1251 = vmatprep.subr.bf16.mxu0 0
        %1252 = vmatpush1.bf16.msra.mxu0 %v1221
        %1253 = vmatprep.subr.bf16.mxu0 0
        %1254 = vmatpush1.bf16.msra.mxu0 %v1222
        %1255 = vmatprep.subr.bf16.mxu0 0
        %1256 = vmatpush1.bf16.msra.mxu0 %v1223
        %1257 = vmatprep.subr.bf16.mxu0 0
        %1258 = vmatpush1.bf16.msra.mxu0 %v1224
        %1259 = vmatprep.subr.bf16.mxu0 0
        %1260 = vmatpush1.bf16.msra.mxu0 %v1225
        %1261 = vmatprep.subr.bf16.mxu0 0
        %1262 = vmatpush1.bf16.msra.mxu0 %v1226
        %1263 = vmatprep.subr.bf16.mxu0 0
        %1264 = vmatpush1.bf16.msra.mxu0 %v1227
        %1265 = vmatprep.subr.bf16.mxu0 0
        %1266 = vmatpush1.bf16.msra.mxu0 %v1228
        %1267 = vmatprep.subr.bf16.mxu0 0
        %1268 = vmatpush1.bf16.msra.mxu0 %v1229
        %1269 = vmatprep.subr.bf16.mxu0 0
        %1270 = vmatpush1.bf16.msra.mxu0 %v1247
        %1271 = vmatprep.subr.bf16.mxu0 0
        %1272 = vmatpush1.bf16.msra.mxu0 0
        %1273 = vmatprep.subr.bf16.mxu0 0
        %1274 = vmatpush1.bf16.msra.mxu0 0
        %1275 = vmatprep.subr.bf16.mxu0 0
        %1276 = vmatpush1.bf16.msra.mxu0 0
        %1277 = vmatprep.subr.bf16.mxu0 0
        %1278 = vmatpush1.bf16.msra.mxu0 0
        %1279 = vmatprep.subr.bf16.mxu0 0
        %1280 = vmatpush1.bf16.msra.mxu0 0
        %1281 = vmatprep.mubr.bf16.mxu0 %v1243
        %1282 = vmatmul.mubr.bf16.gmra.mrb[0].mxu0 %v1155
        %v1283 = vpop.f32.mrb[0].mxu0
        %v1284 = vadd.f32 0.0, %v1283
        %v1285 = vpop.f32.mrb[0].mxu0
        %v1286 = vpop.f32.mrb[0].mxu0
        %v1287 = vadd.f32 0.0, %v1286
        %v1288 = vpop.f32.mrb[0].mxu0
        %1289 = vdwg.mxu0
        %v1290 = vpack.c.bf16 %v1287, %v1284
        %v1291 = vld [vmem:[%s5] sm:$0xff]
        %v1292 = vld [vmem:[%s5 + $0x8] sm:$0xff]
        %v1293 = vld [vmem:[%s5 + $0x10] sm:$0xff]
        %v1294 = vld [vmem:[%s5 + $0x18] sm:$0xff]
        %v1295 = vld [vmem:[%s5 + $0x20] sm:$0xff]
        %v1296 = vld [vmem:[%s5 + $0x28] sm:$0xff]
        %v1297 = vld [vmem:[%s5 + $0x30] sm:$0xff]
        %v1298 = vld [vmem:[%s5 + $0x38] sm:$0xff]
        %v1299 = vld [vmem:[%s5 + $0x40] sm:$0xff]
        %v1300 = vld [vmem:[%s5 + $0x48] sm:$0xff]
        %v1301 = vld [vmem:[%s5 + $0x50] sm:$0x33]
        %s1302 = scalar_lea.vmem %s5, 88
        %v1303 = vld [vmem:[%s1302] sm:$0xff]
        %v1304 = vld [vmem:[%s1302 + $0x8] sm:$0xff]
        %v1305 = vld [vmem:[%s1302 + $0x10] sm:$0xff]
        %v1306 = vld [vmem:[%s1302 + $0x18] sm:$0xff]
        %v1307 = vld [vmem:[%s1302 + $0x20] sm:$0xff]
        %v1308 = vld [vmem:[%s1302 + $0x28] sm:$0xff]
        %v1309 = vld [vmem:[%s1302 + $0x30] sm:$0xff]
        %v1310 = vld [vmem:[%s1302 + $0x38] sm:$0xff]
        %v1311 = vld [vmem:[%s1302 + $0x40] sm:$0xff]
        %v1312 = vld [vmem:[%s1302 + $0x48] sm:$0xff]
        %v1313 = vld [vmem:[%s1302 + $0x50] sm:$0x33]
        %v1315 = vshrl.u32 %v1290, 16
        %v1317 = vshll.u32 %v1290, 16
        %v1319 = vrot.slane %v1317, 1
        %v1320 = vor.u32 %v1315, %v1319
        %v1332 = vunpack.c.l.b16 %v1303
        %v1333 = vunpack.c.h.b16 %v1303
        %v1334 = vunpack.c.l.b16 %v1304
        %v1335 = vunpack.c.h.b16 %v1304
        %v1336 = vunpack.c.l.b16 %v1305
        %v1337 = vunpack.c.h.b16 %v1305
        %v1338 = vunpack.c.l.b16 %v1306
        %v1339 = vunpack.c.h.b16 %v1306
        %v1340 = vunpack.c.l.b16 %v1307
        %v1341 = vunpack.c.h.b16 %v1307
        %v1342 = vunpack.c.l.b16 %v1308
        %v1343 = vunpack.c.h.b16 %v1308
        %v1344 = vunpack.c.l.b16 %v1309
        %v1345 = vunpack.c.h.b16 %v1309
        %v1346 = vunpack.c.l.b16 %v1310
        %v1347 = vunpack.c.h.b16 %v1310
        %v1348 = vunpack.c.l.b16 %v1311
        %v1349 = vunpack.c.h.b16 %v1311
        %v1350 = vunpack.c.l.b16 %v1312
        %v1351 = vunpack.c.h.b16 %v1312
        %v1352 = vunpack.c.l.b16 %v1313
        %v1353 = vunpack.c.h.b16 %v1313
        %v1354 = vpack.c.b16 %v1334, %v1332
        %v1355 = vpack.c.b16 %v1335, %v1333
        %v1356 = vpack.c.b16 %v1338, %v1336
        %v1357 = vpack.c.b16 %v1339, %v1337
        %v1358 = vpack.c.b16 %v1342, %v1340
        %v1359 = vpack.c.b16 %v1343, %v1341
        %v1360 = vpack.c.b16 %v1346, %v1344
        %v1361 = vpack.c.b16 %v1347, %v1345
        %v1362 = vpack.c.b16 %v1350, %v1348
        %v1363 = vpack.c.b16 %v1351, %v1349
        %v1364 = vpack.c.b16 %v1352, %v1352
        %v1365 = vpack.c.b16 %v1353, %v1353
        %vm1376 = vcmask 687104
        %v1378 = vsel %vm1376, %v1320, 0
        %vm1380 = vcmask 1041408
        %v1382 = vsel %vm1380, %v1364, 0
        %v1385 = vsel %vm1380, %v1365, 0
        %1387 = vmatprep.subr.bf16.mxu0 %v1355
        %1388 = vmatpush1.bf16.msra.mxu0 %v1354
        %1389 = vmatprep.subr.bf16.mxu0 %v1357
        %1390 = vmatpush1.bf16.msra.mxu0 %v1356
        %1391 = vmatprep.subr.bf16.mxu0 %v1359
        %1392 = vmatpush1.bf16.msra.mxu0 %v1358
        %1393 = vmatprep.subr.bf16.mxu0 %v1361
        %1394 = vmatpush1.bf16.msra.mxu0 %v1360
        %1395 = vmatprep.subr.bf16.mxu0 %v1363
        %1396 = vmatpush1.bf16.msra.mxu0 %v1362
        %1397 = vmatprep.subr.bf16.mxu0 %v1385
        %1398 = vmatpush1.bf16.msra.mxu0 %v1382
        %1399 = vmatprep.subr.bf16.mxu0 0
        %1400 = vmatpush1.bf16.msra.mxu0 0
        %1401 = vmatprep.subr.bf16.mxu0 0
        %1402 = vmatpush1.bf16.msra.mxu0 0
        %1403 = vmatprep.subr.bf16.mxu0 0
        %1404 = vmatpush1.bf16.msra.mxu0 0
        %1405 = vmatprep.subr.bf16.mxu0 0
        %1406 = vmatpush1.bf16.msra.mxu0 0
        %1407 = vmatprep.subr.bf16.mxu0 0
        %1408 = vmatpush1.bf16.msra.mxu0 0
        %1409 = vmatprep.subr.bf16.mxu0 0
        %1410 = vmatpush1.bf16.msra.mxu0 0
        %1411 = vmatprep.subr.bf16.mxu0 0
        %1412 = vmatpush1.bf16.msra.mxu0 0
        %1413 = vmatprep.subr.bf16.mxu0 0
        %1414 = vmatpush1.bf16.msra.mxu0 0
        %1415 = vmatprep.subr.bf16.mxu0 0
        %1416 = vmatpush1.bf16.msra.mxu0 0
        %1417 = vmatprep.subr.bf16.mxu0 0
        %1418 = vmatpush1.bf16.msra.mxu0 0
        %1419 = vmatprep.mubr.bf16.mxu0 0
        %1420 = vmatmul.mubr.bf16.gmra.mrb[0].mxu0 %v1378
        %v1421 = vpop.f32.mrb[0].mxu0
        %v1422 = vadd.f32 0.0, %v1421
        %v1423 = vpop.f32.mrb[0].mxu0
        %v1424 = vadd.f32 0.0, %v1423
        %v1425 = vpop.f32.mrb[0].mxu0
        %v1426 = vadd.f32 0.0, %v1425
        %v1427 = vpop.f32.mrb[0].mxu0
        %v1428 = vadd.f32 0.0, %v1427
        %1429 = vdwg.mxu0
        %v1441 = vunpack.c.l.b16 %v1291
        %v1442 = vunpack.c.h.b16 %v1291
        %v1443 = vunpack.c.l.b16 %v1292
        %v1444 = vunpack.c.h.b16 %v1292
        %v1445 = vunpack.c.l.b16 %v1293
        %v1446 = vunpack.c.h.b16 %v1293
        %v1447 = vunpack.c.l.b16 %v1294
        %v1448 = vunpack.c.h.b16 %v1294
        %v1449 = vunpack.c.l.b16 %v1295
        %v1450 = vunpack.c.h.b16 %v1295
        %v1451 = vunpack.c.l.b16 %v1296
        %v1452 = vunpack.c.h.b16 %v1296
        %v1453 = vunpack.c.l.b16 %v1297
        %v1454 = vunpack.c.h.b16 %v1297
        %v1455 = vunpack.c.l.b16 %v1298
        %v1456 = vunpack.c.h.b16 %v1298
        %v1457 = vunpack.c.l.b16 %v1299
        %v1458 = vunpack.c.h.b16 %v1299
        %v1459 = vunpack.c.l.b16 %v1300
        %v1460 = vunpack.c.h.b16 %v1300
        %v1461 = vunpack.c.l.b16 %v1301
        %v1462 = vunpack.c.h.b16 %v1301
        %v1463 = vpack.c.b16 %v1443, %v1441
        %v1464 = vpack.c.b16 %v1444, %v1442
        %v1465 = vpack.c.b16 %v1447, %v1445
        %v1466 = vpack.c.b16 %v1448, %v1446
        %v1467 = vpack.c.b16 %v1451, %v1449
        %v1468 = vpack.c.b16 %v1452, %v1450
        %v1469 = vpack.c.b16 %v1455, %v1453
        %v1470 = vpack.c.b16 %v1456, %v1454
        %v1471 = vpack.c.b16 %v1459, %v1457
        %v1472 = vpack.c.b16 %v1460, %v1458
        %v1473 = vpack.c.b16 %v1461, %v1461
        %v1474 = vpack.c.b16 %v1462, %v1462
        %v1485 = vsel %vm1376, %v1290, 0
        %v1488 = vsel %vm1380, %v1473, 0
        %v1491 = vsel %vm1380, %v1474, 0
        %1493 = vmatprep.subr.bf16.mxu0 %v1464
        %1494 = vmatpush1.bf16.msra.mxu0 %v1463
        %1495 = vmatprep.subr.bf16.mxu0 %v1466
        %1496 = vmatpush1.bf16.msra.mxu0 %v1465
        %1497 = vmatprep.subr.bf16.mxu0 %v1468
        %1498 = vmatpush1.bf16.msra.mxu0 %v1467
        %1499 = vmatprep.subr.bf16.mxu0 %v1470
        %1500 = vmatpush1.bf16.msra.mxu0 %v1469
        %1501 = vmatprep.subr.bf16.mxu0 %v1472
        %1502 = vmatpush1.bf16.msra.mxu0 %v1471
        %1503 = vmatprep.subr.bf16.mxu0 %v1491
        %1504 = vmatpush1.bf16.msra.mxu0 %v1488
        %1505 = vmatprep.subr.bf16.mxu0 0
        %1506 = vmatpush1.bf16.msra.mxu0 0
        %1507 = vmatprep.subr.bf16.mxu0 0
        %1508 = vmatpush1.bf16.msra.mxu0 0
        %1509 = vmatprep.subr.bf16.mxu0 0
        %1510 = vmatpush1.bf16.msra.mxu0 0
        %1511 = vmatprep.subr.bf16.mxu0 0
        %1512 = vmatpush1.bf16.msra.mxu0 0
        %1513 = vmatprep.subr.bf16.mxu0 0
        %1514 = vmatpush1.bf16.msra.mxu0 0
        %1515 = vmatprep.subr.bf16.mxu0 0
        %1516 = vmatpush1.bf16.msra.mxu0 0
        %1517 = vmatprep.subr.bf16.mxu0 0
        %1518 = vmatpush1.bf16.msra.mxu0 0
        %1519 = vmatprep.subr.bf16.mxu0 0
        %1520 = vmatpush1.bf16.msra.mxu0 0
        %1521 = vmatprep.subr.bf16.mxu0 0
        %1522 = vmatpush1.bf16.msra.mxu0 0
        %1523 = vmatprep.subr.bf16.mxu0 0
        %1524 = vmatpush1.bf16.msra.mxu0 0
        %1525 = vmatprep.mubr.bf16.mxu0 0
        %1526 = vmatmul.mubr.bf16.gmra.mrb[0].mxu0 %v1485
        %v1527 = vpop.f32.mrb[0].mxu0
        %v1528 = vadd.f32 %v1422, %v1527
        %v1529 = vpop.f32.mrb[0].mxu0
        %v1530 = vadd.f32 %v1424, %v1529
        %v1531 = vpop.f32.mrb[0].mxu0
        %v1532 = vadd.f32 %v1426, %v1531
        %v1533 = vpop.f32.mrb[0].mxu0
        %v1534 = vadd.f32 %v1428, %v1533
        %1535 = vdwg.mxu0
        %s1536 = scalar_lea.vmem %s5, 176
        %v1537 = vld [vmem:[%s1536] sm:$0xff]
        %v1538 = vld [vmem:[%s1536 + $0x8] sm:$0xff]
        %v1539 = vld [vmem:[%s1536 + $0x10] sm:$0xff]
        %v1540 = vld [vmem:[%s1536 + $0x18] sm:$0xff]
        %v1541 = vld [vmem:[%s1536 + $0x20] sm:$0xff]
        %v1542 = vld [vmem:[%s1536 + $0x28] sm:$0xff]
        %v1543 = vld [vmem:[%s1536 + $0x30] sm:$0xff]
        %v1544 = vld [vmem:[%s1536 + $0x38] sm:$0xff]
        %v1545 = vld [vmem:[%s1536 + $0x40] sm:$0xff]
        %v1546 = vld [vmem:[%s1536 + $0x48] sm:$0xff]
        %v1547 = vld [vmem:[%s1536 + $0x50] sm:$0x33]
        %v1549 = vrot.slane %v1290, 1
        %v1561 = vunpack.c.l.b16 %v1537
        %v1562 = vunpack.c.h.b16 %v1537
        %v1563 = vunpack.c.l.b16 %v1538
        %v1564 = vunpack.c.h.b16 %v1538
        %v1565 = vunpack.c.l.b16 %v1539
        %v1566 = vunpack.c.h.b16 %v1539
        %v1567 = vunpack.c.l.b16 %v1540
        %v1568 = vunpack.c.h.b16 %v1540
        %v1569 = vunpack.c.l.b16 %v1541
        %v1570 = vunpack.c.h.b16 %v1541
        %v1571 = vunpack.c.l.b16 %v1542
        %v1572 = vunpack.c.h.b16 %v1542
        %v1573 = vunpack.c.l.b16 %v1543
        %v1574 = vunpack.c.h.b16 %v1543
        %v1575 = vunpack.c.l.b16 %v1544
        %v1576 = vunpack.c.h.b16 %v1544
        %v1577 = vunpack.c.l.b16 %v1545
        %v1578 = vunpack.c.h.b16 %v1545
        %v1579 = vunpack.c.l.b16 %v1546
        %v1580 = vunpack.c.h.b16 %v1546
        %v1581 = vunpack.c.l.b16 %v1547
        %v1582 = vunpack.c.h.b16 %v1547
        %v1583 = vpack.c.b16 %v1563, %v1561
        %v1584 = vpack.c.b16 %v1564, %v1562
        %v1585 = vpack.c.b16 %v1567, %v1565
        %v1586 = vpack.c.b16 %v1568, %v1566
        %v1587 = vpack.c.b16 %v1571, %v1569
        %v1588 = vpack.c.b16 %v1572, %v1570
        %v1589 = vpack.c.b16 %v1575, %v1573
        %v1590 = vpack.c.b16 %v1576, %v1574
        %v1591 = vpack.c.b16 %v1579, %v1577
        %v1592 = vpack.c.b16 %v1580, %v1578
        %v1593 = vpack.c.b16 %v1581, %v1581
        %v1594 = vpack.c.b16 %v1582, %v1582
        %v1606 = vsel %vm1376, %v1549, 0
        %v1609 = vsel %vm1380, %v1593, 0
        %v1612 = vsel %vm1380, %v1594, 0
        %1614 = vmatprep.subr.bf16.mxu0 %v1584
        %1615 = vmatpush1.bf16.msra.mxu0 %v1583
        %1616 = vmatprep.subr.bf16.mxu0 %v1586
        %1617 = vmatpush1.bf16.msra.mxu0 %v1585
        %1618 = vmatprep.subr.bf16.mxu0 %v1588
        %1619 = vmatpush1.bf16.msra.mxu0 %v1587
        %1620 = vmatprep.subr.bf16.mxu0 %v1590
        %1621 = vmatpush1.bf16.msra.mxu0 %v1589
        %1622 = vmatprep.subr.bf16.mxu0 %v1592
        %1623 = vmatpush1.bf16.msra.mxu0 %v1591
        %1624 = vmatprep.subr.bf16.mxu0 %v1612
        %1625 = vmatpush1.bf16.msra.mxu0 %v1609
        %1626 = vmatprep.subr.bf16.mxu0 0
        %1627 = vmatpush1.bf16.msra.mxu0 0
        %1628 = vmatprep.subr.bf16.mxu0 0
        %1629 = vmatpush1.bf16.msra.mxu0 0
        %1630 = vmatprep.subr.bf16.mxu0 0
        %1631 = vmatpush1.bf16.msra.mxu0 0
        %1632 = vmatprep.subr.bf16.mxu0 0
        %1633 = vmatpush1.bf16.msra.mxu0 0
        %1634 = vmatprep.subr.bf16.mxu0 0
        %1635 = vmatpush1.bf16.msra.mxu0 0
        %1636 = vmatprep.subr.bf16.mxu0 0
        %1637 = vmatpush1.bf16.msra.mxu0 0
        %1638 = vmatprep.subr.bf16.mxu0 0
        %1639 = vmatpush1.bf16.msra.mxu0 0
        %1640 = vmatprep.subr.bf16.mxu0 0
        %1641 = vmatpush1.bf16.msra.mxu0 0
        %1642 = vmatprep.subr.bf16.mxu0 0
        %1643 = vmatpush1.bf16.msra.mxu0 0
        %1644 = vmatprep.subr.bf16.mxu0 0
        %1645 = vmatpush1.bf16.msra.mxu0 0
        %1646 = vmatprep.mubr.bf16.mxu0 0
        %1647 = vmatmul.mubr.bf16.gmra.mrb[0].mxu0 %v1606
        %v1648 = vpop.f32.mrb[0].mxu0
        %v1649 = vadd.f32 0.0, %v1648
        %v1650 = vpop.f32.mrb[0].mxu0
        %v1651 = vadd.f32 0.0, %v1650
        %v1652 = vpop.f32.mrb[0].mxu0
        %v1653 = vadd.f32 0.0, %v1652
        %v1654 = vpop.f32.mrb[0].mxu0
        %v1655 = vadd.f32 0.0, %v1654
        %1656 = vdwg.mxu0
        %v1657 = vadd.f32 %v1528, %v1649
        %v1658 = vadd.f32 %v1530, %v1651
        %v1659 = vadd.f32 %v1532, %v1653
        %v1660 = vadd.f32 %v1534, %v1655
        %s1661 = scalar_lea.vmem %s5, 264
        %v1662 = vld [vmem:[%s1661] sm:$0xff]
        %v1663 = vld [vmem:[%s1661 + $0x8] sm:$0xff]
        %v1664 = vld [vmem:[%s1661 + $0x10] sm:$0xff]
        %v1665 = vld [vmem:[%s1661 + $0x18] sm:$0xff]
        %v1666 = vld [vmem:[%s1661 + $0x20] sm:$0xff]
        %v1667 = vld [vmem:[%s1661 + $0x28] sm:$0xff]
        %v1668 = vld [vmem:[%s1661 + $0x30] sm:$0xff]
        %v1669 = vld [vmem:[%s1661 + $0x38] sm:$0xff]
        %v1670 = vld [vmem:[%s1661 + $0x40] sm:$0xff]
        %v1671 = vld [vmem:[%s1661 + $0x48] sm:$0xff]
        %v1672 = vld [vmem:[%s1661 + $0x50] sm:$0x33]
        %v1673 = vrot.slane %v1315, 1
        %v1674 = vrot.slane %v1317, 2
        %v1675 = vor.u32 %v1673, %v1674
        %v1687 = vunpack.c.l.b16 %v1662
        %v1688 = vunpack.c.h.b16 %v1662
        %v1689 = vunpack.c.l.b16 %v1663
        %v1690 = vunpack.c.h.b16 %v1663
        %v1691 = vunpack.c.l.b16 %v1664
        %v1692 = vunpack.c.h.b16 %v1664
        %v1693 = vunpack.c.l.b16 %v1665
        %v1694 = vunpack.c.h.b16 %v1665
        %v1695 = vunpack.c.l.b16 %v1666
        %v1696 = vunpack.c.h.b16 %v1666
        %v1697 = vunpack.c.l.b16 %v1667
        %v1698 = vunpack.c.h.b16 %v1667
        %v1699 = vunpack.c.l.b16 %v1668
        %v1700 = vunpack.c.h.b16 %v1668
        %v1701 = vunpack.c.l.b16 %v1669
        %v1702 = vunpack.c.h.b16 %v1669
        %v1703 = vunpack.c.l.b16 %v1670
        %v1704 = vunpack.c.h.b16 %v1670
        %v1705 = vunpack.c.l.b16 %v1671
        %v1706 = vunpack.c.h.b16 %v1671
        %v1707 = vunpack.c.l.b16 %v1672
        %v1708 = vunpack.c.h.b16 %v1672
        %v1709 = vpack.c.b16 %v1689, %v1687
        %v1710 = vpack.c.b16 %v1690, %v1688
        %v1711 = vpack.c.b16 %v1693, %v1691
        %v1712 = vpack.c.b16 %v1694, %v1692
        %v1713 = vpack.c.b16 %v1697, %v1695
        %v1714 = vpack.c.b16 %v1698, %v1696
        %v1715 = vpack.c.b16 %v1701, %v1699
        %v1716 = vpack.c.b16 %v1702, %v1700
        %v1717 = vpack.c.b16 %v1705, %v1703
        %v1718 = vpack.c.b16 %v1706, %v1704
        %v1719 = vpack.c.b16 %v1707, %v1707
        %v1720 = vpack.c.b16 %v1708, %v1708
        %v1732 = vsel %vm1376, %v1675, 0
        %v1735 = vsel %vm1380, %v1719, 0
        %v1738 = vsel %vm1380, %v1720, 0
        %1740 = vmatprep.subr.bf16.mxu0 %v1710
        %1741 = vmatpush1.bf16.msra.mxu0 %v1709
        %1742 = vmatprep.subr.bf16.mxu0 %v1712
        %1743 = vmatpush1.bf16.msra.mxu0 %v1711
        %1744 = vmatprep.subr.bf16.mxu0 %v1714
        %1745 = vmatpush1.bf16.msra.mxu0 %v1713
        %1746 = vmatprep.subr.bf16.mxu0 %v1716
        %1747 = vmatpush1.bf16.msra.mxu0 %v1715
        %1748 = vmatprep.subr.bf16.mxu0 %v1718
        %1749 = vmatpush1.bf16.msra.mxu0 %v1717
        %1750 = vmatprep.subr.bf16.mxu0 %v1738
        %1751 = vmatpush1.bf16.msra.mxu0 %v1735
        %1752 = vmatprep.subr.bf16.mxu0 0
        %1753 = vmatpush1.bf16.msra.mxu0 0
        %1754 = vmatprep.subr.bf16.mxu0 0
        %1755 = vmatpush1.bf16.msra.mxu0 0
        %1756 = vmatprep.subr.bf16.mxu0 0
        %1757 = vmatpush1.bf16.msra.mxu0 0
        %1758 = vmatprep.subr.bf16.mxu0 0
        %1759 = vmatpush1.bf16.msra.mxu0 0
        %1760 = vmatprep.subr.bf16.mxu0 0
        %1761 = vmatpush1.bf16.msra.mxu0 0
        %1762 = vmatprep.subr.bf16.mxu0 0
        %1763 = vmatpush1.bf16.msra.mxu0 0
        %1764 = vmatprep.subr.bf16.mxu0 0
        %1765 = vmatpush1.bf16.msra.mxu0 0
        %1766 = vmatprep.subr.bf16.mxu0 0
        %1767 = vmatpush1.bf16.msra.mxu0 0
        %1768 = vmatprep.subr.bf16.mxu0 0
        %1769 = vmatpush1.bf16.msra.mxu0 0
        %1770 = vmatprep.subr.bf16.mxu0 0
        %1771 = vmatpush1.bf16.msra.mxu0 0
        %1772 = vmatprep.mubr.bf16.mxu0 0
        %1773 = vmatmul.mubr.bf16.gmra.mrb[0].mxu0 %v1732
        %v1774 = vpop.f32.mrb[0].mxu0
        %v1775 = vadd.f32 0.0, %v1774
        %v1776 = vpop.f32.mrb[0].mxu0
        %v1777 = vadd.f32 0.0, %v1776
        %v1778 = vpop.f32.mrb[0].mxu0
        %v1779 = vadd.f32 0.0, %v1778
        %v1780 = vpop.f32.mrb[0].mxu0
        %v1781 = vadd.f32 0.0, %v1780
        %1782 = vdwg.mxu0
        %v1783 = vadd.f32 %v1657, %v1775
        %v1784 = vadd.f32 %v1658, %v1777
        %v1785 = vadd.f32 %v1659, %v1779
        %v1786 = vadd.f32 %v1660, %v1781
        %s1787 = scalar_lea.vmem %s5, 352
        %v1788 = vld [vmem:[%s1787] sm:$0xff]
        %v1789 = vld [vmem:[%s1787 + $0x8] sm:$0xff]
        %v1790 = vld [vmem:[%s1787 + $0x10] sm:$0xff]
        %v1791 = vld [vmem:[%s1787 + $0x18] sm:$0xff]
        %v1792 = vld [vmem:[%s1787 + $0x20] sm:$0xff]
        %v1793 = vld [vmem:[%s1787 + $0x28] sm:$0xff]
        %v1794 = vld [vmem:[%s1787 + $0x30] sm:$0xff]
        %v1795 = vld [vmem:[%s1787 + $0x38] sm:$0xff]
        %v1796 = vld [vmem:[%s1787 + $0x40] sm:$0xff]
        %v1797 = vld [vmem:[%s1787 + $0x48] sm:$0xff]
        %v1798 = vld [vmem:[%s1787 + $0x50] sm:$0x33]
        %v1799 = vrot.slane %v1290, 2
        %v1811 = vunpack.c.l.b16 %v1788
        %v1812 = vunpack.c.h.b16 %v1788
        %v1813 = vunpack.c.l.b16 %v1789
        %v1814 = vunpack.c.h.b16 %v1789
        %v1815 = vunpack.c.l.b16 %v1790
        %v1816 = vunpack.c.h.b16 %v1790
        %v1817 = vunpack.c.l.b16 %v1791
        %v1818 = vunpack.c.h.b16 %v1791
        %v1819 = vunpack.c.l.b16 %v1792
        %v1820 = vunpack.c.h.b16 %v1792
        %v1821 = vunpack.c.l.b16 %v1793
        %v1822 = vunpack.c.h.b16 %v1793
        %v1823 = vunpack.c.l.b16 %v1794
        %v1824 = vunpack.c.h.b16 %v1794
        %v1825 = vunpack.c.l.b16 %v1795
        %v1826 = vunpack.c.h.b16 %v1795
        %v1827 = vunpack.c.l.b16 %v1796
        %v1828 = vunpack.c.h.b16 %v1796
        %v1829 = vunpack.c.l.b16 %v1797
        %v1830 = vunpack.c.h.b16 %v1797
        %v1831 = vunpack.c.l.b16 %v1798
        %v1832 = vunpack.c.h.b16 %v1798
        %v1833 = vpack.c.b16 %v1813, %v1811
        %v1834 = vpack.c.b16 %v1814, %v1812
        %v1835 = vpack.c.b16 %v1817, %v1815
        %v1836 = vpack.c.b16 %v1818, %v1816
        %v1837 = vpack.c.b16 %v1821, %v1819
        %v1838 = vpack.c.b16 %v1822, %v1820
        %v1839 = vpack.c.b16 %v1825, %v1823
        %v1840 = vpack.c.b16 %v1826, %v1824
        %v1841 = vpack.c.b16 %v1829, %v1827
        %v1842 = vpack.c.b16 %v1830, %v1828
        %v1843 = vpack.c.b16 %v1831, %v1831
        %v1844 = vpack.c.b16 %v1832, %v1832
        %v1856 = vsel %vm1376, %v1799, 0
        %v1859 = vsel %vm1380, %v1843, 0
        %v1862 = vsel %vm1380, %v1844, 0
        %1864 = vmatprep.subr.bf16.mxu0 %v1834
        %1865 = vmatpush1.bf16.msra.mxu0 %v1833
        %1866 = vmatprep.subr.bf16.mxu0 %v1836
        %1867 = vmatpush1.bf16.msra.mxu0 %v1835
        %1868 = vmatprep.subr.bf16.mxu0 %v1838
        %1869 = vmatpush1.bf16.msra.mxu0 %v1837
        %1870 = vmatprep.subr.bf16.mxu0 %v1840
        %1871 = vmatpush1.bf16.msra.mxu0 %v1839
        %1872 = vmatprep.subr.bf16.mxu0 %v1842
        %1873 = vmatpush1.bf16.msra.mxu0 %v1841
        %1874 = vmatprep.subr.bf16.mxu0 %v1862
        %1875 = vmatpush1.bf16.msra.mxu0 %v1859
        %1876 = vmatprep.subr.bf16.mxu0 0
        %1877 = vmatpush1.bf16.msra.mxu0 0
        %1878 = vmatprep.subr.bf16.mxu0 0
        %1879 = vmatpush1.bf16.msra.mxu0 0
        %1880 = vmatprep.subr.bf16.mxu0 0
        %1881 = vmatpush1.bf16.msra.mxu0 0
        %1882 = vmatprep.subr.bf16.mxu0 0
        %1883 = vmatpush1.bf16.msra.mxu0 0
        %1884 = vmatprep.subr.bf16.mxu0 0
        %1885 = vmatpush1.bf16.msra.mxu0 0
        %1886 = vmatprep.subr.bf16.mxu0 0
        %1887 = vmatpush1.bf16.msra.mxu0 0
        %1888 = vmatprep.subr.bf16.mxu0 0
        %1889 = vmatpush1.bf16.msra.mxu0 0
        %1890 = vmatprep.subr.bf16.mxu0 0
        %1891 = vmatpush1.bf16.msra.mxu0 0
        %1892 = vmatprep.subr.bf16.mxu0 0
        %1893 = vmatpush1.bf16.msra.mxu0 0
        %1894 = vmatprep.subr.bf16.mxu0 0
        %1895 = vmatpush1.bf16.msra.mxu0 0
        %1896 = vmatprep.mubr.bf16.mxu0 0
        %1897 = vmatmul.mubr.bf16.gmra.mrb[0].mxu0 %v1856
        %v1898 = vpop.f32.mrb[0].mxu0
        %v1899 = vadd.f32 0.0, %v1898
        %v1900 = vpop.f32.mrb[0].mxu0
        %v1901 = vadd.f32 0.0, %v1900
        %v1902 = vpop.f32.mrb[0].mxu0
        %v1903 = vadd.f32 0.0, %v1902
        %v1904 = vpop.f32.mrb[0].mxu0
        %v1905 = vadd.f32 0.0, %v1904
        %1906 = vdwg.mxu0
        %v1907 = vadd.f32 %v1783, %v1899
        %v1908 = vadd.f32 %v1784, %v1901
        %v1909 = vadd.f32 %v1785, %v1903
        %v1910 = vadd.f32 %v1786, %v1905
        %v1911 = vld [vmem:[%s6] sm:$0x3]
        %v1913 = vlaneseq
        %v1914 = vshrl.u32 %v1913, 7
        %v1915 = vsub.s32 0, %v1914
        %v1916 = vrot.slane %v1911, %v1915
        %v1917 = vlaneseq
        %v1918 = vshrl.u32 %v1917, 7
        %v1919 = vsub.s32 1, %v1918
        %v1920 = vrot.slane %v1911, %v1919
        %v1923 = vadd.f32 %v1907, %v1916
        %v1924 = vadd.f32 %v1908, %v1920
        %v1925 = vadd.f32 %v1909, %v1916
        %v1926 = vadd.f32 %v1910, %v1920
        %v1927 = vmax.f32 %v1923, 0.0
        %v1928 = vmax.f32 %v1924, 0.0
        %v1929 = vmax.f32 %v1925, 0.0
        %v1930 = vmax.f32 %v1926, 0.0
        %v1935 = vrot.slane %v1927, 1
        %v1936 = vrot.slane %v1929, 1
        %v1937 = vsel %vm1011, %v1935, %v1936
        %v1938 = vrot.slane %v1928, 1
        %v1939 = vrot.slane %v1930, 1
        %v1940 = vsel %vm1011, %v1938, %v1939
        %v1945 = vmax.f32 %v1927, %v1937
        %v1946 = vmax.f32 %v1928, %v1940
        %v1947 = vmax.f32 %v1929, %v1936
        %v1948 = vmax.f32 %v1930, %v1939
        %1953 = vrot.lane.b32.xlu0 %v1945, 112
        %v1954 = vpop.permute.xlu0 %1953
        %1955 = vrot.lane.b32.xlu0 %v1946, 112
        %v1956 = vpop.permute.xlu0 %1955
        %1957 = vrot.lane.b32.xlu0 %v1947, 112
        %v1958 = vpop.permute.xlu0 %1957
        %1959 = vrot.lane.b32.xlu0 %v1948, 112
        %v1960 = vpop.permute.xlu0 %1959
        %vm1961 = vcmask 916480
        %v1962 = vsel %vm1961, %v1954, %v1956
        %v1963 = vsel %vm1961, %v1958, %v1960
        %v1968 = vmax.f32 %v1945, %v1962
        %v1969 = vmax.f32 %v1946, %v1956
        %v1970 = vmax.f32 %v1947, %v1963
        %v1971 = vmax.f32 %v1948, %v1960
        %v1972 = vpack.c.bf16 %v1970, %v1968
        %v1973 = vpack.c.bf16 %v1971, %v1969
        %v1974 = vld [vmem:[%s7] sm:$0x7]
        %vm1975 = vcmask 72704
        %v1977 = vsel %vm1975, %v1974, 0
        %vm1979 = vcmask 1043456
        %v1980 = vsel %vm1979, 4294967295, 65535
        %v1981 = vsel %vm1102, %v1980, 0
        %v1983 = vand.u32 %v1972, %v1981
        %v1986 = vand.u32 %v1973, %v1981
        %1988 = vmatprep.subr.bf16.mxu0 %v1986
        %1989 = vmatpush1.bf16.msra.mxu0 %v1983
        %1990 = vmatprep.subr.bf16.mxu0 0
        %1991 = vmatpush1.bf16.msra.mxu0 0
        %1992 = vmatprep.subr.bf16.mxu0 0
        %1993 = vmatpush1.bf16.msra.mxu0 0
        %1994 = vmatprep.subr.bf16.mxu0 0
        %1995 = vmatpush1.bf16.msra.mxu0 0
        %1996 = vmatprep.subr.bf16.mxu0 0
        %1997 = vmatpush1.bf16.msra.mxu0 0
        %1998 = vmatprep.subr.bf16.mxu0 0
        %1999 = vmatpush1.bf16.msra.mxu0 0
        %2000 = vmatprep.subr.bf16.mxu0 0
        %2001 = vmatpush1.bf16.msra.mxu0 0
        %2002 = vmatprep.subr.bf16.mxu0 0
        %2003 = vmatpush1.bf16.msra.mxu0 0
        %2004 = vmatprep.subr.bf16.mxu0 0
        %2005 = vmatpush1.bf16.msra.mxu0 0
        %2006 = vmatprep.subr.bf16.mxu0 0
        %2007 = vmatpush1.bf16.msra.mxu0 0
        %2008 = vmatprep.subr.bf16.mxu0 0
        %2009 = vmatpush1.bf16.msra.mxu0 0
        %2010 = vmatprep.subr.bf16.mxu0 0
        %2011 = vmatpush1.bf16.msra.mxu0 0
        %2012 = vmatprep.subr.bf16.mxu0 0
        %2013 = vmatpush1.bf16.msra.mxu0 0
        %2014 = vmatprep.subr.bf16.mxu0 0
        %2015 = vmatpush1.bf16.msra.mxu0 0
        %2016 = vmatprep.subr.bf16.mxu0 0
        %2017 = vmatpush1.bf16.msra.mxu0 0
        %2018 = vmatprep.subr.bf16.mxu0 0
        %2019 = vmatpush1.bf16.msra.mxu0 0
        %2020 = vmatprep.mubr.bf16.mxu0 0
        %2021 = vmatmul.mubr.bf16.gmra.mrb[0].mxu0 %v1977
        %v2022 = vpop.f32.mrb[0].mxu0
        %v2023 = vadd.f32 0.0, %v2022
        %v2024 = vpop.f32.mrb[0].mxu0
        %v2025 = vadd.f32 0.0, %v2024
        %v2026 = vpop.f32.mrb[0].mxu0
        %v2027 = vpop.f32.mrb[0].mxu0
        %2028 = vdwg.mxu0
        %v2029 = vpack.c.bf16 %v2023, %v2023
        %v2030 = vpack.c.bf16 %v2025, %v2025
        %v2031 = vld [vmem:[%s8] sm:$0xf]
        %v2032 = vld [vmem:[%s8 + $0x4] sm:$0xf]
        %v2033 = vld [vmem:[%s8 + $0x8] sm:$0xf]
        %v2034 = vld [vmem:[%s8 + $0xc] sm:$0xf]
        %v2035 = vld [vmem:[%s8 + $0x10] sm:$0xf]
        %v2036 = vld [vmem:[%s8 + $0x14] sm:$0xf]
        %v2037 = vld [vmem:[%s8 + $0x18] sm:$0xf]
        %v2038 = vld [vmem:[%s8 + $0x1c] sm:$0xf]
        %v2039 = vld [vmem:[%s8 + $0x20] sm:$0xf]
        %v2040 = vld [vmem:[%s8 + $0x24] sm:$0xf]
        %v2041 = vld [vmem:[%s8 + $0x28] sm:$0xf]
        %v2042 = vld [vmem:[%s8 + $0x2c] sm:$0xf]
        %v2043 = vld [vmem:[%s8 + $0x30] sm:$0xf]
        %v2044 = vld [vmem:[%s8 + $0x34] sm:$0xf]
        %v2045 = vld [vmem:[%s8 + $0x38] sm:$0xf]
        %v2046 = vld [vmem:[%s8 + $0x3c] sm:$0xf]
        %v2047 = vld [vmem:[%s8 + $0x40] sm:$0xf]
        %v2048 = vld [vmem:[%s8 + $0x44] sm:$0xf]
        %v2067 = vunpack.c.l.b16 %v2031
        %v2068 = vunpack.c.l.b16 %v2032
        %v2069 = vunpack.c.l.b16 %v2033
        %v2070 = vunpack.c.l.b16 %v2034
        %v2071 = vunpack.c.l.b16 %v2035
        %v2072 = vunpack.c.l.b16 %v2036
        %v2073 = vunpack.c.l.b16 %v2037
        %v2074 = vunpack.c.l.b16 %v2038
        %v2075 = vunpack.c.l.b16 %v2039
        %v2076 = vunpack.c.l.b16 %v2040
        %v2077 = vunpack.c.l.b16 %v2041
        %v2078 = vunpack.c.l.b16 %v2042
        %v2079 = vunpack.c.l.b16 %v2043
        %v2080 = vunpack.c.l.b16 %v2044
        %v2081 = vunpack.c.l.b16 %v2045
        %v2082 = vunpack.c.l.b16 %v2046
        %v2083 = vunpack.c.l.b16 %v2047
        %v2084 = vunpack.c.l.b16 %v2048
        %v2085 = vpack.c.b16 %v2068, %v2067
        %v2086 = vpack.c.b16 %v2070, %v2069
        %v2087 = vpack.c.b16 %v2072, %v2071
        %v2088 = vpack.c.b16 %v2074, %v2073
        %v2089 = vpack.c.b16 %v2076, %v2075
        %v2090 = vpack.c.b16 %v2078, %v2077
        %v2091 = vpack.c.b16 %v2080, %v2079
        %v2092 = vpack.c.b16 %v2082, %v2081
        %v2093 = vpack.c.b16 %v2084, %v2083
        %vm2103 = vcmask 130048
        %v2105 = vsel %vm2103, %v2030, 0
        %2107 = vmatprep.subr.bf16.mxu0 0
        %2108 = vmatpush1.bf16.msra.mxu0 %v2085
        %2109 = vmatprep.subr.bf16.mxu0 0
        %2110 = vmatpush1.bf16.msra.mxu0 %v2086
        %2111 = vmatprep.subr.bf16.mxu0 0
        %2112 = vmatpush1.bf16.msra.mxu0 %v2087
        %2113 = vmatprep.subr.bf16.mxu0 0
        %2114 = vmatpush1.bf16.msra.mxu0 %v2088
        %2115 = vmatprep.subr.bf16.mxu0 0
        %2116 = vmatpush1.bf16.msra.mxu0 %v2089
        %2117 = vmatprep.subr.bf16.mxu0 0
        %2118 = vmatpush1.bf16.msra.mxu0 %v2090
        %2119 = vmatprep.subr.bf16.mxu0 0
        %2120 = vmatpush1.bf16.msra.mxu0 %v2091
        %2121 = vmatprep.subr.bf16.mxu0 0
        %2122 = vmatpush1.bf16.msra.mxu0 %v2092
        %2123 = vmatprep.subr.bf16.mxu0 0
        %2124 = vmatpush1.bf16.msra.mxu0 %v2093
        %2125 = vmatprep.subr.bf16.mxu0 0
        %2126 = vmatpush1.bf16.msra.mxu0 0
        %2127 = vmatprep.subr.bf16.mxu0 0
        %2128 = vmatpush1.bf16.msra.mxu0 0
        %2129 = vmatprep.subr.bf16.mxu0 0
        %2130 = vmatpush1.bf16.msra.mxu0 0
        %2131 = vmatprep.subr.bf16.mxu0 0
        %2132 = vmatpush1.bf16.msra.mxu0 0
        %2133 = vmatprep.subr.bf16.mxu0 0
        %2134 = vmatpush1.bf16.msra.mxu0 0
        %2135 = vmatprep.subr.bf16.mxu0 0
        %2136 = vmatpush1.bf16.msra.mxu0 0
        %2137 = vmatprep.subr.bf16.mxu0 0
        %2138 = vmatpush1.bf16.msra.mxu0 0
        %2139 = vmatprep.mubr.bf16.mxu0 %v2105
        %2140 = vmatmul.mubr.bf16.gmra.mrb[0].mxu0 %v2029
        %v2141 = vpop.f32.mrb[0].mxu0
        %v2142 = vadd.f32 0.0, %v2141
        %v2143 = vpop.f32.mrb[0].mxu0
        %v2144 = vpop.f32.mrb[0].mxu0
        %v2145 = vpop.f32.mrb[0].mxu0
        %2146 = vdwg.mxu0
        %v2147 = vpack.c.bf16 %v2142, %v2142
        %v2148 = vld [vmem:[%s9] sm:$0xf]
        %v2149 = vld [vmem:[%s9 + $0x4] sm:$0xf]
        %v2150 = vld [vmem:[%s9 + $0x8] sm:$0xf]
        %v2151 = vld [vmem:[%s9 + $0xc] sm:$0xf]
        %v2152 = vld [vmem:[%s9 + $0x10] sm:$0xf]
        %v2153 = vld [vmem:[%s9 + $0x14] sm:$0xf]
        %v2154 = vld [vmem:[%s9 + $0x18] sm:$0xf]
        %v2155 = vld [vmem:[%s9 + $0x1c] sm:$0xf]
        %v2156 = vld [vmem:[%s9 + $0x20] sm:$0xf]
        %v2157 = vld [vmem:[%s9 + $0x24] sm:$0xf]
        %s2158 = scalar_lea.vmem %s9, 40
        %v2159 = vld [vmem:[%s2158] sm:$0xf]
        %v2160 = vld [vmem:[%s2158 + $0x4] sm:$0xf]
        %v2161 = vld [vmem:[%s2158 + $0x8] sm:$0xf]
        %v2162 = vld [vmem:[%s2158 + $0xc] sm:$0xf]
        %v2163 = vld [vmem:[%s2158 + $0x10] sm:$0xf]
        %v2164 = vld [vmem:[%s2158 + $0x14] sm:$0xf]
        %v2165 = vld [vmem:[%s2158 + $0x18] sm:$0xf]
        %v2166 = vld [vmem:[%s2158 + $0x1c] sm:$0xf]
        %v2167 = vld [vmem:[%s2158 + $0x20] sm:$0xf]
        %v2168 = vld [vmem:[%s2158 + $0x24] sm:$0xf]
        %v2170 = vshrl.u32 %v2147, 16
        %v2182 = vunpack.c.l.b16 %v2159
        %v2183 = vunpack.c.l.b16 %v2160
        %v2184 = vunpack.c.l.b16 %v2161
        %v2185 = vunpack.c.l.b16 %v2162
        %v2186 = vunpack.c.l.b16 %v2163
        %v2187 = vunpack.c.l.b16 %v2164
        %v2188 = vunpack.c.l.b16 %v2165
        %v2189 = vunpack.c.l.b16 %v2166
        %v2190 = vunpack.c.l.b16 %v2167
        %v2191 = vunpack.c.l.b16 %v2168
        %v2192 = vpack.c.b16 %v2183, %v2182
        %v2193 = vpack.c.b16 %v2185, %v2184
        %v2194 = vpack.c.b16 %v2187, %v2186
        %v2195 = vpack.c.b16 %v2189, %v2188
        %v2196 = vpack.c.b16 %v2191, %v2190
        %vm2202 = vcmask 654336
        %v2204 = vsel %vm2202, %v2170, 0
        %2206 = vmatprep.subr.bf16.mxu0 0
        %2207 = vmatpush1.bf16.msra.mxu0 %v2192
        %2208 = vmatprep.subr.bf16.mxu0 0
        %2209 = vmatpush1.bf16.msra.mxu0 %v2193
        %2210 = vmatprep.subr.bf16.mxu0 0
        %2211 = vmatpush1.bf16.msra.mxu0 %v2194
        %2212 = vmatprep.subr.bf16.mxu0 0
        %2213 = vmatpush1.bf16.msra.mxu0 %v2195
        %2214 = vmatprep.subr.bf16.mxu0 0
        %2215 = vmatpush1.bf16.msra.mxu0 %v2196
        %2216 = vmatprep.subr.bf16.mxu0 0
        %2217 = vmatpush1.bf16.msra.mxu0 0
        %2218 = vmatprep.subr.bf16.mxu0 0
        %2219 = vmatpush1.bf16.msra.mxu0 0
        %2220 = vmatprep.subr.bf16.mxu0 0
        %2221 = vmatpush1.bf16.msra.mxu0 0
        %2222 = vmatprep.subr.bf16.mxu0 0
        %2223 = vmatpush1.bf16.msra.mxu0 0
        %2224 = vmatprep.subr.bf16.mxu0 0
        %2225 = vmatpush1.bf16.msra.mxu0 0
        %2226 = vmatprep.subr.bf16.mxu0 0
        %2227 = vmatpush1.bf16.msra.mxu0 0
        %2228 = vmatprep.subr.bf16.mxu0 0
        %2229 = vmatpush1.bf16.msra.mxu0 0
        %2230 = vmatprep.subr.bf16.mxu0 0
        %2231 = vmatpush1.bf16.msra.mxu0 0
        %2232 = vmatprep.subr.bf16.mxu0 0
        %2233 = vmatpush1.bf16.msra.mxu0 0
        %2234 = vmatprep.subr.bf16.mxu0 0
        %2235 = vmatpush1.bf16.msra.mxu0 0
        %2236 = vmatprep.subr.bf16.mxu0 0
        %2237 = vmatpush1.bf16.msra.mxu0 0
        %2238 = vmatprep.mubr.bf16.mxu0 0
        %2239 = vmatmul.mubr.bf16.gmra.mrb[0].mxu0 %v2204
        %v2240 = vpop.f32.mrb[0].mxu0
        %v2241 = vadd.f32 0.0, %v2240
        %v2242 = vpop.f32.mrb[0].mxu0
        %v2243 = vpop.f32.mrb[0].mxu0
        %v2244 = vpop.f32.mrb[0].mxu0
        %2245 = vdwg.mxu0
        %v2256 = vunpack.c.l.b16 %v2148
        %v2257 = vunpack.c.l.b16 %v2149
        %v2258 = vunpack.c.l.b16 %v2150
        %v2259 = vunpack.c.l.b16 %v2151
        %v2260 = vunpack.c.l.b16 %v2152
        %v2261 = vunpack.c.l.b16 %v2153
        %v2262 = vunpack.c.l.b16 %v2154
        %v2263 = vunpack.c.l.b16 %v2155
        %v2264 = vunpack.c.l.b16 %v2156
        %v2265 = vunpack.c.l.b16 %v2157
        %v2266 = vpack.c.b16 %v2257, %v2256
        %v2267 = vpack.c.b16 %v2259, %v2258
        %v2268 = vpack.c.b16 %v2261, %v2260
        %v2269 = vpack.c.b16 %v2263, %v2262
        %v2270 = vpack.c.b16 %v2265, %v2264
        %v2276 = vsel %vm2202, %v2147, 0
        %2278 = vmatprep.subr.bf16.mxu0 0
        %2279 = vmatpush1.bf16.msra.mxu0 %v2266
        %2280 = vmatprep.subr.bf16.mxu0 0
        %2281 = vmatpush1.bf16.msra.mxu0 %v2267
        %2282 = vmatprep.subr.bf16.mxu0 0
        %2283 = vmatpush1.bf16.msra.mxu0 %v2268
        %2284 = vmatprep.subr.bf16.mxu0 0
        %2285 = vmatpush1.bf16.msra.mxu0 %v2269
        %2286 = vmatprep.subr.bf16.mxu0 0
        %2287 = vmatpush1.bf16.msra.mxu0 %v2270
        %2288 = vmatprep.subr.bf16.mxu0 0
        %2289 = vmatpush1.bf16.msra.mxu0 0
        %2290 = vmatprep.subr.bf16.mxu0 0
        %2291 = vmatpush1.bf16.msra.mxu0 0
        %2292 = vmatprep.subr.bf16.mxu0 0
        %2293 = vmatpush1.bf16.msra.mxu0 0
        %2294 = vmatprep.subr.bf16.mxu0 0
        %2295 = vmatpush1.bf16.msra.mxu0 0
        %2296 = vmatprep.subr.bf16.mxu0 0
        %2297 = vmatpush1.bf16.msra.mxu0 0
        %2298 = vmatprep.subr.bf16.mxu0 0
        %2299 = vmatpush1.bf16.msra.mxu0 0
        %2300 = vmatprep.subr.bf16.mxu0 0
        %2301 = vmatpush1.bf16.msra.mxu0 0
        %2302 = vmatprep.subr.bf16.mxu0 0
        %2303 = vmatpush1.bf16.msra.mxu0 0
        %2304 = vmatprep.subr.bf16.mxu0 0
        %2305 = vmatpush1.bf16.msra.mxu0 0
        %2306 = vmatprep.subr.bf16.mxu0 0
        %2307 = vmatpush1.bf16.msra.mxu0 0
        %2308 = vmatprep.subr.bf16.mxu0 0
        %2309 = vmatpush1.bf16.msra.mxu0 0
        %2310 = vmatprep.mubr.bf16.mxu0 0
        %2311 = vmatmul.mubr.bf16.gmra.mrb[0].mxu0 %v2276
        %v2312 = vpop.f32.mrb[0].mxu0
        %v2313 = vadd.f32 %v2241, %v2312
        %v2314 = vpop.f32.mrb[0].mxu0
        %v2315 = vpop.f32.mrb[0].mxu0
        %v2316 = vpop.f32.mrb[0].mxu0
        %2317 = vdwg.mxu0
        %s2318 = scalar_lea.vmem %s9, 80
        %v2319 = vld [vmem:[%s2318] sm:$0xf]
        %v2320 = vld [vmem:[%s2318 + $0x4] sm:$0xf]
        %v2321 = vld [vmem:[%s2318 + $0x8] sm:$0xf]
        %v2322 = vld [vmem:[%s2318 + $0xc] sm:$0xf]
        %v2323 = vld [vmem:[%s2318 + $0x10] sm:$0xf]
        %v2324 = vld [vmem:[%s2318 + $0x14] sm:$0xf]
        %v2325 = vld [vmem:[%s2318 + $0x18] sm:$0xf]
        %v2326 = vld [vmem:[%s2318 + $0x1c] sm:$0xf]
        %v2327 = vld [vmem:[%s2318 + $0x20] sm:$0xf]
        %v2328 = vld [vmem:[%s2318 + $0x24] sm:$0xf]
        %v2330 = vrot.slane %v2147, 1
        %v2341 = vunpack.c.l.b16 %v2319
        %v2342 = vunpack.c.l.b16 %v2320
        %v2343 = vunpack.c.l.b16 %v2321
        %v2344 = vunpack.c.l.b16 %v2322
        %v2345 = vunpack.c.l.b16 %v2323
        %v2346 = vunpack.c.l.b16 %v2324
        %v2347 = vunpack.c.l.b16 %v2325
        %v2348 = vunpack.c.l.b16 %v2326
        %v2349 = vunpack.c.l.b16 %v2327
        %v2350 = vunpack.c.l.b16 %v2328
        %v2351 = vpack.c.b16 %v2342, %v2341
        %v2352 = vpack.c.b16 %v2344, %v2343
        %v2353 = vpack.c.b16 %v2346, %v2345
        %v2354 = vpack.c.b16 %v2348, %v2347
        %v2355 = vpack.c.b16 %v2350, %v2349
        %v2362 = vsel %vm2202, %v2330, 0
        %2364 = vmatprep.subr.bf16.mxu0 0
        %2365 = vmatpush1.bf16.msra.mxu0 %v2351
        %2366 = vmatprep.subr.bf16.mxu0 0
        %2367 = vmatpush1.bf16.msra.mxu0 %v2352
        %2368 = vmatprep.subr.bf16.mxu0 0
        %2369 = vmatpush1.bf16.msra.mxu0 %v2353
        %2370 = vmatprep.subr.bf16.mxu0 0
        %2371 = vmatpush1.bf16.msra.mxu0 %v2354
        %2372 = vmatprep.subr.bf16.mxu0 0
        %2373 = vmatpush1.bf16.msra.mxu0 %v2355
        %2374 = vmatprep.subr.bf16.mxu0 0
        %2375 = vmatpush1.bf16.msra.mxu0 0
        %2376 = vmatprep.subr.bf16.mxu0 0
        %2377 = vmatpush1.bf16.msra.mxu0 0
        %2378 = vmatprep.subr.bf16.mxu0 0
        %2379 = vmatpush1.bf16.msra.mxu0 0
        %2380 = vmatprep.subr.bf16.mxu0 0
        %2381 = vmatpush1.bf16.msra.mxu0 0
        %2382 = vmatprep.subr.bf16.mxu0 0
        %2383 = vmatpush1.bf16.msra.mxu0 0
        %2384 = vmatprep.subr.bf16.mxu0 0
        %2385 = vmatpush1.bf16.msra.mxu0 0
        %2386 = vmatprep.subr.bf16.mxu0 0
        %2387 = vmatpush1.bf16.msra.mxu0 0
        %2388 = vmatprep.subr.bf16.mxu0 0
        %2389 = vmatpush1.bf16.msra.mxu0 0
        %2390 = vmatprep.subr.bf16.mxu0 0
        %2391 = vmatpush1.bf16.msra.mxu0 0
        %2392 = vmatprep.subr.bf16.mxu0 0
        %2393 = vmatpush1.bf16.msra.mxu0 0
        %2394 = vmatprep.subr.bf16.mxu0 0
        %2395 = vmatpush1.bf16.msra.mxu0 0
        %2396 = vmatprep.mubr.bf16.mxu0 0
        %2397 = vmatmul.mubr.bf16.gmra.mrb[0].mxu0 %v2362
        %v2398 = vpop.f32.mrb[0].mxu0
        %v2399 = vadd.f32 0.0, %v2398
        %v2400 = vpop.f32.mrb[0].mxu0
        %v2401 = vpop.f32.mrb[0].mxu0
        %v2402 = vpop.f32.mrb[0].mxu0
        %2403 = vdwg.mxu0
        %v2404 = vadd.f32 %v2313, %v2399
        %s2405 = scalar_lea.vmem %s9, 120
        %v2406 = vld [vmem:[%s2405] sm:$0xf]
        %v2407 = vld [vmem:[%s2405 + $0x4] sm:$0xf]
        %v2408 = vld [vmem:[%s2405 + $0x8] sm:$0xf]
        %v2409 = vld [vmem:[%s2405 + $0xc] sm:$0xf]
        %v2410 = vld [vmem:[%s2405 + $0x10] sm:$0xf]
        %v2411 = vld [vmem:[%s2405 + $0x14] sm:$0xf]
        %v2412 = vld [vmem:[%s2405 + $0x18] sm:$0xf]
        %v2413 = vld [vmem:[%s2405 + $0x1c] sm:$0xf]
        %v2414 = vld [vmem:[%s2405 + $0x20] sm:$0xf]
        %v2415 = vld [vmem:[%s2405 + $0x24] sm:$0xf]
        %v2416 = vrot.slane %v2170, 1
        %v2427 = vunpack.c.l.b16 %v2406
        %v2428 = vunpack.c.l.b16 %v2407
        %v2429 = vunpack.c.l.b16 %v2408
        %v2430 = vunpack.c.l.b16 %v2409
        %v2431 = vunpack.c.l.b16 %v2410
        %v2432 = vunpack.c.l.b16 %v2411
        %v2433 = vunpack.c.l.b16 %v2412
        %v2434 = vunpack.c.l.b16 %v2413
        %v2435 = vunpack.c.l.b16 %v2414
        %v2436 = vunpack.c.l.b16 %v2415
        %v2437 = vpack.c.b16 %v2428, %v2427
        %v2438 = vpack.c.b16 %v2430, %v2429
        %v2439 = vpack.c.b16 %v2432, %v2431
        %v2440 = vpack.c.b16 %v2434, %v2433
        %v2441 = vpack.c.b16 %v2436, %v2435
        %v2448 = vsel %vm2202, %v2416, 0
        %2450 = vmatprep.subr.bf16.mxu0 0
        %2451 = vmatpush1.bf16.msra.mxu0 %v2437
        %2452 = vmatprep.subr.bf16.mxu0 0
        %2453 = vmatpush1.bf16.msra.mxu0 %v2438
        %2454 = vmatprep.subr.bf16.mxu0 0
        %2455 = vmatpush1.bf16.msra.mxu0 %v2439
        %2456 = vmatprep.subr.bf16.mxu0 0
        %2457 = vmatpush1.bf16.msra.mxu0 %v2440
        %2458 = vmatprep.subr.bf16.mxu0 0
        %2459 = vmatpush1.bf16.msra.mxu0 %v2441
        %2460 = vmatprep.subr.bf16.mxu0 0
        %2461 = vmatpush1.bf16.msra.mxu0 0
        %2462 = vmatprep.subr.bf16.mxu0 0
        %2463 = vmatpush1.bf16.msra.mxu0 0
        %2464 = vmatprep.subr.bf16.mxu0 0
        %2465 = vmatpush1.bf16.msra.mxu0 0
        %2466 = vmatprep.subr.bf16.mxu0 0
        %2467 = vmatpush1.bf16.msra.mxu0 0
        %2468 = vmatprep.subr.bf16.mxu0 0
        %2469 = vmatpush1.bf16.msra.mxu0 0
        %2470 = vmatprep.subr.bf16.mxu0 0
        %2471 = vmatpush1.bf16.msra.mxu0 0
        %2472 = vmatprep.subr.bf16.mxu0 0
        %2473 = vmatpush1.bf16.msra.mxu0 0
        %2474 = vmatprep.subr.bf16.mxu0 0
        %2475 = vmatpush1.bf16.msra.mxu0 0
        %2476 = vmatprep.subr.bf16.mxu0 0
        %2477 = vmatpush1.bf16.msra.mxu0 0
        %2478 = vmatprep.subr.bf16.mxu0 0
        %2479 = vmatpush1.bf16.msra.mxu0 0
        %2480 = vmatprep.subr.bf16.mxu0 0
        %2481 = vmatpush1.bf16.msra.mxu0 0
        %2482 = vmatprep.mubr.bf16.mxu0 0
        %2483 = vmatmul.mubr.bf16.gmra.mrb[0].mxu0 %v2448
        %v2484 = vpop.f32.mrb[0].mxu0
        %v2485 = vadd.f32 0.0, %v2484
        %v2486 = vpop.f32.mrb[0].mxu0
        %v2487 = vpop.f32.mrb[0].mxu0
        %v2488 = vpop.f32.mrb[0].mxu0
        %2489 = vdwg.mxu0
        %v2490 = vadd.f32 %v2404, %v2485
        %s2491 = scalar_lea.vmem %s9, 160
        %v2492 = vld [vmem:[%s2491] sm:$0xf]
        %v2493 = vld [vmem:[%s2491 + $0x4] sm:$0xf]
        %v2494 = vld [vmem:[%s2491 + $0x8] sm:$0xf]
        %v2495 = vld [vmem:[%s2491 + $0xc] sm:$0xf]
        %v2496 = vld [vmem:[%s2491 + $0x10] sm:$0xf]
        %v2497 = vld [vmem:[%s2491 + $0x14] sm:$0xf]
        %v2498 = vld [vmem:[%s2491 + $0x18] sm:$0xf]
        %v2499 = vld [vmem:[%s2491 + $0x1c] sm:$0xf]
        %v2500 = vld [vmem:[%s2491 + $0x20] sm:$0xf]
        %v2501 = vld [vmem:[%s2491 + $0x24] sm:$0xf]
        %v2502 = vrot.slane %v2147, 2
        %v2513 = vunpack.c.l.b16 %v2492
        %v2514 = vunpack.c.l.b16 %v2493
        %v2515 = vunpack.c.l.b16 %v2494
        %v2516 = vunpack.c.l.b16 %v2495
        %v2517 = vunpack.c.l.b16 %v2496
        %v2518 = vunpack.c.l.b16 %v2497
        %v2519 = vunpack.c.l.b16 %v2498
        %v2520 = vunpack.c.l.b16 %v2499
        %v2521 = vunpack.c.l.b16 %v2500
        %v2522 = vunpack.c.l.b16 %v2501
        %v2523 = vpack.c.b16 %v2514, %v2513
        %v2524 = vpack.c.b16 %v2516, %v2515
        %v2525 = vpack.c.b16 %v2518, %v2517
        %v2526 = vpack.c.b16 %v2520, %v2519
        %v2527 = vpack.c.b16 %v2522, %v2521
        %v2534 = vsel %vm2202, %v2502, 0
        %2536 = vmatprep.subr.bf16.mxu0 0
        %2537 = vmatpush1.bf16.msra.mxu0 %v2523
        %2538 = vmatprep.subr.bf16.mxu0 0
        %2539 = vmatpush1.bf16.msra.mxu0 %v2524
        %2540 = vmatprep.subr.bf16.mxu0 0
        %2541 = vmatpush1.bf16.msra.mxu0 %v2525
        %2542 = vmatprep.subr.bf16.mxu0 0
        %2543 = vmatpush1.bf16.msra.mxu0 %v2526
        %2544 = vmatprep.subr.bf16.mxu0 0
        %2545 = vmatpush1.bf16.msra.mxu0 %v2527
        %2546 = vmatprep.subr.bf16.mxu0 0
        %2547 = vmatpush1.bf16.msra.mxu0 0
        %2548 = vmatprep.subr.bf16.mxu0 0
        %2549 = vmatpush1.bf16.msra.mxu0 0
        %2550 = vmatprep.subr.bf16.mxu0 0
        %2551 = vmatpush1.bf16.msra.mxu0 0
        %2552 = vmatprep.subr.bf16.mxu0 0
        %2553 = vmatpush1.bf16.msra.mxu0 0
        %2554 = vmatprep.subr.bf16.mxu0 0
        %2555 = vmatpush1.bf16.msra.mxu0 0
        %2556 = vmatprep.subr.bf16.mxu0 0
        %2557 = vmatpush1.bf16.msra.mxu0 0
        %2558 = vmatprep.subr.bf16.mxu0 0
        %2559 = vmatpush1.bf16.msra.mxu0 0
        %2560 = vmatprep.subr.bf16.mxu0 0
        %2561 = vmatpush1.bf16.msra.mxu0 0
        %2562 = vmatprep.subr.bf16.mxu0 0
        %2563 = vmatpush1.bf16.msra.mxu0 0
        %2564 = vmatprep.subr.bf16.mxu0 0
        %2565 = vmatpush1.bf16.msra.mxu0 0
        %2566 = vmatprep.subr.bf16.mxu0 0
        %2567 = vmatpush1.bf16.msra.mxu0 0
        %2568 = vmatprep.mubr.bf16.mxu0 0
        %2569 = vmatmul.mubr.bf16.gmra.mrb[0].mxu0 %v2534
        %v2570 = vpop.f32.mrb[0].mxu0
        %v2571 = vadd.f32 0.0, %v2570
        %v2572 = vpop.f32.mrb[0].mxu0
        %v2573 = vpop.f32.mrb[0].mxu0
        %v2574 = vpop.f32.mrb[0].mxu0
        %2575 = vdwg.mxu0
        %v2576 = vadd.f32 %v2490, %v2571
        %v2577 = vld [vmem:[%s10] sm:$0x1]
        %v2578 = vadd.f32 %v2576, %v2577
        %v2579 = vmax.f32 %v2578, 0.0
        %v2580 = vpack.c.bf16 %v2579, %v2579
        %v2581 = vld [vmem:[%s11] sm:$0xf]
        %v2582 = vld [vmem:[%s11 + $0x4] sm:$0xf]
        %v2583 = vld [vmem:[%s11 + $0x8] sm:$0xf]
        %v2584 = vld [vmem:[%s11 + $0xc] sm:$0xf]
        %v2585 = vld [vmem:[%s11 + $0x10] sm:$0xf]
        %v2586 = vld [vmem:[%s11 + $0x14] sm:$0xf]
        %v2587 = vld [vmem:[%s11 + $0x18] sm:$0xf]
        %v2588 = vld [vmem:[%s11 + $0x1c] sm:$0xf]
        %v2589 = vld [vmem:[%s11 + $0x20] sm:$0xf]
        %v2590 = vld [vmem:[%s11 + $0x24] sm:$0xf]
        %v2591 = vld [vmem:[%s11 + $0x28] sm:$0xf]
        %v2592 = vld [vmem:[%s11 + $0x2c] sm:$0xf]
        %v2593 = vld [vmem:[%s11 + $0x30] sm:$0xf]
        %v2594 = vld [vmem:[%s11 + $0x34] sm:$0xf]
        %v2595 = vld [vmem:[%s11 + $0x38] sm:$0xf]
        %v2596 = vld [vmem:[%s12] sm:$0x1]
        %v2612 = vunpack.c.l.b16 %v2581
        %v2613 = vunpack.c.l.b16 %v2582
        %v2614 = vunpack.c.l.b16 %v2583
        %v2615 = vunpack.c.l.b16 %v2584
        %v2616 = vunpack.c.l.b16 %v2585
        %v2617 = vunpack.c.l.b16 %v2586
        %v2618 = vunpack.c.l.b16 %v2587
        %v2619 = vunpack.c.l.b16 %v2588
        %v2620 = vunpack.c.l.b16 %v2589
        %v2621 = vunpack.c.l.b16 %v2590
        %v2622 = vunpack.c.l.b16 %v2591
        %v2623 = vunpack.c.l.b16 %v2592
        %v2624 = vunpack.c.l.b16 %v2593
        %v2625 = vunpack.c.l.b16 %v2594
        %v2626 = vunpack.c.l.b16 %v2595
        %v2627 = vpack.c.b16 %v2613, %v2612
        %v2628 = vpack.c.b16 %v2615, %v2614
        %v2629 = vpack.c.b16 %v2617, %v2616
        %v2630 = vpack.c.b16 %v2619, %v2618
        %v2631 = vpack.c.b16 %v2621, %v2620
        %v2632 = vpack.c.b16 %v2623, %v2622
        %v2633 = vpack.c.b16 %v2625, %v2624
        %v2634 = vpack.c.b16 %v2626, %v2626
        %vm2642 = vcmask 982016
        %v2644 = vsel %vm2642, %v2580, 0
        %v2647 = vsel %vm1979, %v2634, 0
        %2649 = vmatprep.subr.bf16.mxu0 0
        %2650 = vmatpush1.bf16.msra.mxu0 %v2627
        %2651 = vmatprep.subr.bf16.mxu0 0
        %2652 = vmatpush1.bf16.msra.mxu0 %v2628
        %2653 = vmatprep.subr.bf16.mxu0 0
        %2654 = vmatpush1.bf16.msra.mxu0 %v2629
        %2655 = vmatprep.subr.bf16.mxu0 0
        %2656 = vmatpush1.bf16.msra.mxu0 %v2630
        %2657 = vmatprep.subr.bf16.mxu0 0
        %2658 = vmatpush1.bf16.msra.mxu0 %v2631
        %2659 = vmatprep.subr.bf16.mxu0 0
        %2660 = vmatpush1.bf16.msra.mxu0 %v2632
        %2661 = vmatprep.subr.bf16.mxu0 0
        %2662 = vmatpush1.bf16.msra.mxu0 %v2633
        %2663 = vmatprep.subr.bf16.mxu0 0
        %2664 = vmatpush1.bf16.msra.mxu0 %v2647
        %2665 = vmatprep.subr.bf16.mxu0 0
        %2666 = vmatpush1.bf16.msra.mxu0 0
        %2667 = vmatprep.subr.bf16.mxu0 0
        %2668 = vmatpush1.bf16.msra.mxu0 0
        %2669 = vmatprep.subr.bf16.mxu0 0
        %2670 = vmatpush1.bf16.msra.mxu0 0
        %2671 = vmatprep.subr.bf16.mxu0 0
        %2672 = vmatpush1.bf16.msra.mxu0 0
        %2673 = vmatprep.subr.bf16.mxu0 0
        %2674 = vmatpush1.bf16.msra.mxu0 0
        %2675 = vmatprep.subr.bf16.mxu0 0
        %2676 = vmatpush1.bf16.msra.mxu0 0
        %2677 = vmatprep.subr.bf16.mxu0 0
        %2678 = vmatpush1.bf16.msra.mxu0 0
        %2679 = vmatprep.subr.bf16.mxu0 0
        %2680 = vmatpush1.bf16.msra.mxu0 0
        %2681 = vmatprep.mubr.bf16.mxu0 0
        %2682 = vmatmul.mubr.bf16.gmra.mrb[0].mxu0 %v2644
        %v2683 = vpop.f32.mrb[0].mxu0
        %v2684 = vadd.f32 %v2596, %v2683
        %v2685 = vpop.f32.mrb[0].mxu0
        %v2686 = vpop.f32.mrb[0].mxu0
        %v2687 = vpop.f32.mrb[0].mxu0
        %2688 = vdwg.mxu0
        %v2689 = vmax.f32 %v2684, 0.0
        %v2690 = vpack.c.bf16 %v2689, %v2689
        %v2691 = vld [vmem:[%s13] sm:$0xf]
        %v2692 = vld [vmem:[%s13 + $0x4] sm:$0xf]
        %v2693 = vld [vmem:[%s13 + $0x8] sm:$0xf]
        %v2694 = vld [vmem:[%s13 + $0xc] sm:$0xf]
        %v2695 = vld [vmem:[%s13 + $0x10] sm:$0xf]
        %v2696 = vld [vmem:[%s13 + $0x14] sm:$0xf]
        %v2697 = vld [vmem:[%s13 + $0x18] sm:$0xf]
        %v2698 = vld [vmem:[%s13 + $0x1c] sm:$0xf]
        %v2699 = vld [vmem:[%s13 + $0x20] sm:$0xf]
        %v2700 = vld [vmem:[%s13 + $0x24] sm:$0xf]
        %v2701 = vld [vmem:[%s13 + $0x28] sm:$0xf]
        %v2702 = vld [vmem:[%s13 + $0x2c] sm:$0xf]
        %v2703 = vld [vmem:[%s13 + $0x30] sm:$0xf]
        %v2704 = vld [vmem:[%s13 + $0x34] sm:$0xf]
        %v2705 = vld [vmem:[%s13 + $0x38] sm:$0xf]
        %v2706 = vld [vmem:[%s13 + $0x3c] sm:$0xf]
        %v2707 = vld [vmem:[%s14] sm:$0x1]
        %v2724 = vunpack.c.l.b16 %v2691
        %v2725 = vunpack.c.l.b16 %v2692
        %v2726 = vunpack.c.l.b16 %v2693
        %v2727 = vunpack.c.l.b16 %v2694
        %v2728 = vunpack.c.l.b16 %v2695
        %v2729 = vunpack.c.l.b16 %v2696
        %v2730 = vunpack.c.l.b16 %v2697
        %v2731 = vunpack.c.l.b16 %v2698
        %v2732 = vunpack.c.l.b16 %v2699
        %v2733 = vunpack.c.l.b16 %v2700
        %v2734 = vunpack.c.l.b16 %v2701
        %v2735 = vunpack.c.l.b16 %v2702
        %v2736 = vunpack.c.l.b16 %v2703
        %v2737 = vunpack.c.l.b16 %v2704
        %v2738 = vunpack.c.l.b16 %v2705
        %v2739 = vunpack.c.l.b16 %v2706
        %v2740 = vpack.c.b16 %v2725, %v2724
        %v2741 = vpack.c.b16 %v2727, %v2726
        %v2742 = vpack.c.b16 %v2729, %v2728
        %v2743 = vpack.c.b16 %v2731, %v2730
        %v2744 = vpack.c.b16 %v2733, %v2732
        %v2745 = vpack.c.b16 %v2735, %v2734
        %v2746 = vpack.c.b16 %v2737, %v2736
        %v2747 = vpack.c.b16 %v2739, %v2738
        %2756 = vmatprep.subr.bf16.mxu0 0
        %2757 = vmatpush1.bf16.msra.mxu0 %v2740
        %2758 = vmatprep.subr.bf16.mxu0 0
        %2759 = vmatpush1.bf16.msra.mxu0 %v2741
        %2760 = vmatprep.subr.bf16.mxu0 0
        %2761 = vmatpush1.bf16.msra.mxu0 %v2742
        %2762 = vmatprep.subr.bf16.mxu0 0
        %2763 = vmatpush1.bf16.msra.mxu0 %v2743
        %2764 = vmatprep.subr.bf16.mxu0 0
        %2765 = vmatpush1.bf16.msra.mxu0 %v2744
        %2766 = vmatprep.subr.bf16.mxu0 0
        %2767 = vmatpush1.bf16.msra.mxu0 %v2745
        %2768 = vmatprep.subr.bf16.mxu0 0
        %2769 = vmatpush1.bf16.msra.mxu0 %v2746
        %2770 = vmatprep.subr.bf16.mxu0 0
        %2771 = vmatpush1.bf16.msra.mxu0 %v2747
        %2772 = vmatprep.subr.bf16.mxu0 0
        %2773 = vmatpush1.bf16.msra.mxu0 0
        %2774 = vmatprep.subr.bf16.mxu0 0
        %2775 = vmatpush1.bf16.msra.mxu0 0
        %2776 = vmatprep.subr.bf16.mxu0 0
        %2777 = vmatpush1.bf16.msra.mxu0 0
        %2778 = vmatprep.subr.bf16.mxu0 0
        %2779 = vmatpush1.bf16.msra.mxu0 0
        %2780 = vmatprep.subr.bf16.mxu0 0
        %2781 = vmatpush1.bf16.msra.mxu0 0
        %2782 = vmatprep.subr.bf16.mxu0 0
        %2783 = vmatpush1.bf16.msra.mxu0 0
        %2784 = vmatprep.subr.bf16.mxu0 0
        %2785 = vmatpush1.bf16.msra.mxu0 0
        %2786 = vmatprep.subr.bf16.mxu0 0
        %2787 = vmatpush1.bf16.msra.mxu0 0
        %2788 = vmatprep.mubr.bf16.mxu0 0
        %2789 = vmatmul.mubr.bf16.gmra.mrb[0].mxu0 %v2690
        %v2790 = vpop.f32.mrb[0].mxu0
        %v2791 = vadd.f32 %v2707, %v2790
        %v2792 = vpop.f32.mrb[0].mxu0
        %v2793 = vpop.f32.mrb[0].mxu0
        %v2794 = vpop.f32.mrb[0].mxu0
        %2795 = vdwg.mxu0
        %v2796 = vmax.f32 %v2791, 0.0
        %2797 = vst [vmem:[%s486] sm:$0x1] %v2796
        %s2798 = sand.u32 %s357, 1
        %s2799 = scalar_lea.sflag [#allocation3], %s2798
        %s2800 = sand.u32 %s357, 1
        %s2801 = scalar_lea.vmem [#allocation2], %s2800
        // Predicated region
        $region81: #{lenet5_forward.1} parent=79 // pred_check
          %p2802 = pneg %p367
        $region82: #{lenet5_forward.1} parent=79 // pred_check_branch
          %2804 = sbr.rel (%p2802) target = $region84
        $region83: #{lenet5_forward.1} parent=79 // pred_region
          %s2806 = ssub.s32 16, 16
          %2807 = vsyncadd %s2799, %s2806
          %s2808 = smul.addr %s29, 16
          %s2809 = scalar_lea.hbm %s15, %s2808
          %s2811 = sshll.u32 %s2801, 4
          %s2812 = int_to_ptr.vmem [resolvable:$true] %s2811
          %2814 = dma.vmem_to_hbm [thread:$0]  %s2812, 16, %s2809, %s2799
        $region84: #{lenet5_forward.1} parent=79 // pred_fallthru
          _
      $region80: #{lenet5_forward.1} parent=5 // pred_fallthru
        _
      %p2815 = scmp.le.s32.totalorder 2, %s24
      // Predicated region
      $region85: #{lenet5_forward.1} parent=5 // pred_check
        %p2816 = pneg %p2815
      $region86: #{lenet5_forward.1} parent=5 // pred_check_branch
        %2818 = sbr.rel (%p2816) target = $region88
      $region87: #{lenet5_forward.1} parent=5 // pred_region
        %s2819 = ssub.s32 %s24, 2
        // Predicated region
        $region89: #{lenet5_forward.1} parent=87 // pred_check
          %p2820 = pneg %p373
        $region90: #{lenet5_forward.1} parent=87 // pred_check_branch
          %2822 = sbr.rel (%p2820) target = $region92
        $region91: #{lenet5_forward.1} parent=87 // pred_region
          %s2823 = sand.u32 %s358, 1
          %s2824 = scalar_lea.sflag [#allocation3], %s2823
          %s2825 = sand.u32 %s358, 1
          %s2826 = scalar_lea.vmem [#allocation2], %s2825
          %2827 = dma.done %s2824, 16
        $region92: #{lenet5_forward.1} parent=87 // pred_fallthru
          _
      $region88: #{lenet5_forward.1} parent=5 // pred_fallthru
        _
    $region6: #{lenet5_forward.1} parent=1 // loop_footer
      %s28 = sadd.s32 1, %s24
    $region7: #{lenet5_forward.1} parent=1 // loop_footer_branch
      %23 = sbr.rel target = $region3
    $region8: #{lenet5_forward.1} parent=1 // loop_exit
      _
    %2828 = vsyncpa [#allocation3], 1
    %s2829 = scalar_lea.sflag [#allocation3], 1
    %2830 = vsyncpa %s2829, 1

</llo_original>
